<compile_context>
chip_gen: v7x
topology: tpu7x:2x2x1
jax: 0.10.0
libtpu: 0.0.40
codegen_flags: <defaults>
</compile_context>

<pallas_src>
import functools

import numpy as np
import jax
import jax.numpy as jnp
from jax import lax
from jax.experimental import pallas as pl
from jax.experimental.pallas import tpu as pltpu

BN_EPS = 1e-3        # BatchNorm3d eps=0.001 in the reference module
INIT_PRELU = 0.0     # PReLU default init in the reference module


# ------------------------------ Pallas kernel -------------------------------

def _dualres_kernel(x_ref, mask_ref, w1_ref, w2_ref, prm_ref, o_ref,
                    a_ref, h_ref, *, D, C, H, W):
    """Whole DualRes block for one batch element.

    x_ref   : (D+2, C, Lpp) f32  — depth/space padded input volume
    mask_ref: (1, Lpp)      f32  — interior mask of one padded plane
    w1/w2   : (C, 27*C)     bf16 — tap-stacked conv weights
    prm_ref : (C, 8)        f32  — [s1, t1, a1, s2, b1*s2+t2, a2, b2, 0]
    o_ref   : (D, C, Lo)    f32  — output planes (Lo = H*(W+2), 2 garbage cols)
    a_ref   : (D+2, C, Lpp) f32 scratch — BN1+PReLU1 activation (padded)
    h_ref   : (D+2, C, Lpp) f32 scratch — BN2+PReLU2 intermediate (padded)
    """
    W2 = W + 2
    Lpp = (H + 3) * W2
    Lo = H * W2
    offs = tuple(kh * W2 + kw for kh in range(3) for kw in range(3))

    prm = prm_ref[...]                                  # (C, 8)
    pscale, pshift, palpha = prm[:, 0:1], prm[:, 1:2], prm[:, 2:3]
    escale, eshift, ealpha = prm[:, 3:4], prm[:, 4:5], prm[:, 5:6]
    bias2 = prm[:, 6:7]
    mask = mask_ref[...]                                # (1, Lpp)
    omask = mask[:, W2 + 1: W2 + 1 + Lo]                # (1, Lo) valid-col mask
    w1 = w1_ref[...]
    w2 = w2_ref[...]

    zplane = jnp.zeros((C, Lpp), jnp.float32)
    zl = jnp.zeros((C, W2 + 1), jnp.float32)
    zr = jnp.zeros((C, Lpp - (W2 + 1) - Lo), jnp.float32)

    # Depth pad planes of both scratch volumes are exact zeros (the
    # "keep" mask of v1: BN+PReLU of a zero pad plane is nonzero, so the pad
    # planes must be zeroed AFTER the prologue, never fed through it).
    a_ref[0] = zplane
    a_ref[D + 1] = zplane
    h_ref[0] = zplane
    h_ref[D + 1] = zplane

    # ---- Prologue: BN1 + PReLU1 (+ re-zero of the spatial pad ring) --------
    def prologue(d, c):
        xp = x_ref[d + 1]                               # (C, Lpp) f32
        y = xp * pscale + pshift
        act = jnp.where(y > 0.0, y, palpha * y) * mask
        # bf16 rounding point matches the reference's cast at the conv input;
        # keep the value in a f32 container (cheap, exact).
        a_ref[d + 1] = act.astype(jnp.bfloat16).astype(jnp.float32)
        return c
    lax.fori_loop(0, D, prologue, 0)

    # ---- Tap stacking: (27*C, Lo) operand for one output plane --------------
    def tap_stack(src_ref, d):
        planes = (src_ref[d], src_ref[d + 1], src_ref[d + 2])   # 3 x (C, Lpp)
        stk = jnp.concatenate(
            [planes[kd][:, o: o + Lo] for o in offs for kd in range(3)],
            axis=0)                                     # (27*C, Lo) f32, aligned
        return stk.astype(jnp.bfloat16)                 # single cast per plane

    # ---- Conv1 (+bias1) -> BN2 -> PReLU2, stored padded in VMEM -------------
    def conv1(d, c):
        acc = jnp.dot(w1, tap_stack(a_ref, d),
                      preferred_element_type=jnp.float32)        # (C, Lo) f32
        r = acc * escale + eshift                       # bias1 folded into eshift
        r = jnp.where(r > 0.0, r, ealpha * r) * omask   # zero the 2 garbage cols
        r = r.astype(jnp.bfloat16).astype(jnp.float32)  # reference rounding point
        # Shift into the padded-plane layout: valid flat p maps to p + W2 + 1.
        h_ref[d + 1] = jnp.concatenate([zl, r, zr], axis=-1)     # (C, Lpp)
        return c
    lax.fori_loop(0, D, conv1, 0)

    # ---- Conv2 -> bias2 -> residual add -------------------------------------
    def conv2(d, c):
        acc = jnp.dot(w2, tap_stack(h_ref, d),
                      preferred_element_type=jnp.float32)        # (C, Lo) f32
        res = x_ref[d + 1][:, W2 + 1: W2 + 1 + Lo]      # residual straight from x
        o_ref[d] = acc + bias2 + res
        return c
    lax.fori_loop(0, D, conv2, 0)


# --------------------------- pallas_call wrapper -----------------------------

def _dualres_call(x_pad, mask, w1, w2, prm, *, N, D, C, H, W):
    W2 = W + 2
    Lpp = (H + 3) * W2
    Lo = H * W2

    def full(shape):
        return pl.BlockSpec(shape, lambda n, _s=shape: (0,) * len(_s))

    return pl.pallas_call(
        functools.partial(_dualres_kernel, D=D, C=C, H=H, W=W),
        out_shape=jax.ShapeDtypeStruct((N, D, C, Lo), jnp.float32),
        grid=(N,),
        in_specs=[pl.BlockSpec((None, D + 2, C, Lpp), lambda n: (n, 0, 0, 0)),
                  full((1, Lpp)),
                  full((C, 27 * C)),
                  full((C, 27 * C)),
                  full((C, 8))],
        out_specs=pl.BlockSpec((None, D, C, Lo), lambda n: (n, 0, 0, 0)),
        scratch_shapes=[pltpu.VMEM((D + 2, C, Lpp), jnp.float32),
                        pltpu.VMEM((D + 2, C, Lpp), jnp.float32)],
        compiler_params=pltpu.CompilerParams(
            dimension_semantics=("parallel",)),
    )(x_pad, mask, w1, w2, prm)


# --------------------------- parameter preparation ---------------------------

def prepare_dualres_params(raw):
    """One-time (outside jit) BN folding, param packing, weight tap relayout.

    raw: {'bn1','alpha1','conv1','bn2','alpha2','conv2'} with PyTorch layouts:
    conv weight (Cout, Cin, 3, 3, 3), bias (Cout,), BN dicts gamma/beta/mean/var."""
    def fold(bn):
        scale = bn['gamma'] / jnp.sqrt(bn['var'] + BN_EPS)
        return scale, bn['beta'] - bn['mean'] * scale

    def taps(w):
        # (Cout, Cin, Kd, Kh, Kw) -> (Cout, 27*Cin) bf16 with column index
        # ((kh*3 + kw)*3 + kd)*Cin + cin, matching the in-kernel tap stack.
        co, ci = w.shape[0], w.shape[1]
        return jnp.transpose(w, (0, 3, 4, 2, 1)).reshape(co, 27 * ci).astype(jnp.bfloat16)

    s1, t1 = fold(raw['bn1'])
    s2, t2 = fold(raw['bn2'])
    C = s1.shape[0]
    cols = [s1, t1, raw['alpha1'],
            s2, raw['conv1']['b'] * s2 + t2, raw['alpha2'],   # bias1 folded in
            raw['conv2']['b'], jnp.zeros((C,), jnp.float32)]
    prm = jnp.stack(cols, axis=1).astype(jnp.float32)          # (C, 8)
    return {'w1': taps(raw['conv1']['w']), 'w2': taps(raw['conv2']['w']), 'prm': prm}


# --------------------------------- forward -----------------------------------

def dualres_forward(prep, x_ncdhw):
    """DualRes forward (inference).  x: (N, C, D, H, W) -> (N, C, D, H, W)."""
    N, C, D, H, W = x_ncdhw.shape
    W2 = W + 2
    Lpp = (H + 3) * W2
    Lo = H * W2

    # Depth pad (1,1), H pad (1,2) (extra bottom row keeps flattened tap slices
    # in bounds), W pad (1,1); channel-major planes, flattened in lanes.
    x_t = jnp.transpose(x_ncdhw, (0, 2, 1, 3, 4)).astype(jnp.float32)   # (N,D,C,H,W)
    x_pad = jnp.pad(x_t, ((0, 0), (1, 1), (0, 0), (1, 2), (1, 1)))
    x_pad = x_pad.reshape(N, D + 2, C, Lpp)

    # Interior mask of one padded plane (compile-time constant).
    m = np.zeros((H + 3, W + 2), np.float32)
    m[1:H + 1, 1:W + 1] = 1.0
    mask = jnp.asarray(m.reshape(1, Lpp))

    out = _dualres_call(x_pad, mask, prep['w1'], prep['w2'], prep['prm'],
                        N=N, D=D, C=C, H=H, W=W)                        # (N,D,C,Lo)

    out = out.reshape(N, D, C, H, W2)[..., :W]          # crop the 2 garbage cols
    return jnp.transpose(out, (0, 2, 1, 3, 4))          # back to NCDHW


# ------------------------------ pure-JAX reference ---------------------------

def dualres_reference(raw, x):
    """Reference with matching bf16 rounding points (f32 accumulation)."""
    def bn_prelu(v, bn, alpha):
        scale = bn['gamma'] / jnp.sqrt(bn['var'] + BN_EPS)
        shift = bn['beta'] - bn['mean'] * scale
        b = lambda p: p[None, :, None, None, None]
        y = v * b(scale) + b(shift)
        return jnp.where(y > 0, y, b(alpha) * y)

    def conv(v, p):
        a = v.astype(jnp.bfloat16).astype(jnp.float32)
        w = p['w'].astype(jnp.bfloat16).astype(jnp.float32)
        y = lax.conv_general_dilated(
            a, w, window_strides=(1, 1, 1), padding=[(1, 1)] * 3,
            dimension_numbers=('NCDHW', 'OIDHW', 'NCDHW'),
            precision=lax.Precision.HIGHEST)
        return y + p['b'][None, :, None, None, None]

    h = bn_prelu(x, raw['bn1'], raw['alpha1'])
    h = conv(h, raw['conv1'])
    h = bn_prelu(h, raw['bn2'], raw['alpha2'])
    h = conv(h, raw['conv2'])
    return h + x


# ----------------------------------- main ------------------------------------

if __name__ == "__main__":
    key = jax.random.PRNGKey(0)
    N, C, D, H, W = 2, 8, 16, 16, 16        # DualRes(num_ch=8), batch=2, 16^3 volume
    ks = list(jax.random.split(key, 8))

    def bn_init(k):
        k1, k2, k3, k4 = jax.random.split(k, 4)
        return {'gamma': 1.0 + 0.1 * jax.random.normal(k1, (C,), jnp.float32),
                'beta': 0.1 * jax.random.normal(k2, (C,), jnp.float32),
                'mean': 0.1 * jax.random.normal(k3, (C,), jnp.float32),
                'var': 0.5 + jax.random.uniform(k4, (C,), jnp.float32)}

    def conv_init(k):
        k1, k2 = jax.random.split(k)
        w = jax.random.normal(k1, (C, C, 3, 3, 3), jnp.float32) / np.sqrt(27 * C)
        b = 0.05 * jax.random.normal(k2, (C,), jnp.float32)
        return {'w': w, 'b': b}

    # Non-trivial learnable values (INIT_PRELU=0 default is also supported).
    raw = {'bn1': bn_init(ks[0]),
           'alpha1': INIT_PRELU + 0.1 + 0.05 * jax.random.normal(ks[1], (C,), jnp.float32),
           'conv1': conv_init(ks[2]),
           'bn2': bn_init(ks[3]),
           'alpha2': INIT_PRELU + 0.1 + 0.05 * jax.random.normal(ks[4], (C,), jnp.float32),
           'conv2': conv_init(ks[5])}
    x = jax.random.normal(ks[6], (N, C, D, H, W), jnp.float32)

    prep = prepare_dualres_params(raw)       # one-time folding / weight relayout
    fwd = jax.jit(dualres_forward)
    out = jax.block_until_ready(fwd(prep, x))

    assert out.shape == (N, C, D, H, W), out.shape
    assert bool(jnp.all(jnp.isfinite(out)))

    ref = dualres_reference(raw, x)
    max_err = float(jnp.max(jnp.abs(out - ref)))
    assert max_err < 1e-2, f"max abs error vs reference: {max_err}"

    print("KERNEL_OK")
</pallas_src>

<mosaic_0001>
module attributes {stable_mosaic.version = 11 : i64} {
  func.func @_dualres_kernel(%arg0: i32, %arg1: memref<1x18x8x342xf32, #tpu.memory_space<vmem>>, %arg2: memref<1x342xf32, #tpu.memory_space<vmem>>, %arg3: memref<8x216xbf16, #tpu.memory_space<vmem>>, %arg4: memref<8x216xbf16, #tpu.memory_space<vmem>>, %arg5: memref<8x8xf32, #tpu.memory_space<vmem>>, %arg6: memref<1x16x8x288xf32, #tpu.memory_space<vmem>>, %arg7: memref<18x8x342xf32, #tpu.memory_space<vmem>>, %arg8: memref<18x8x342xf32, #tpu.memory_space<vmem>>) attributes {dimension_semantics = [#tpu.dimension_semantics<parallel>], iteration_bounds = array<i64: 2>, scalar_prefetch = 0 : i64, scratch_operands = 2 : i64, tpu.core_type = #tpu.core_type<tc>, window_params = [{transform_indices = @transform_0, window_bounds = array<i64: 1, 18, 8, 342>}, {pipeline_mode = #tpu.pipeline_mode<synchronous>, transform_indices = @transform_1, window_bounds = array<i64: 1, 342>}, {pipeline_mode = #tpu.pipeline_mode<synchronous>, transform_indices = @transform_2, window_bounds = array<i64: 8, 216>}, {pipeline_mode = #tpu.pipeline_mode<synchronous>, transform_indices = @transform_3, window_bounds = array<i64: 8, 216>}, {pipeline_mode = #tpu.pipeline_mode<synchronous>, transform_indices = @transform_4, window_bounds = array<i64: 8, 8>}, {transform_indices = @transform_5, window_bounds = array<i64: 1, 16, 8, 288>}]} {
    %c0 = arith.constant 0 : index
    %c0_0 = arith.constant 0 : index
    %0 = vector.load %arg5[%c0, %c0_0] : memref<8x8xf32, #tpu.memory_space<vmem>>, vector<8x8xf32>
    %1 = vector.extract_strided_slice %0 {offsets = [0, 0], sizes = [8, 1], strides = [1, 1]} : vector<8x8xf32> to vector<8x1xf32>
    %2 = vector.extract_strided_slice %0 {offsets = [0, 1], sizes = [8, 1], strides = [1, 1]} : vector<8x8xf32> to vector<8x1xf32>
    %3 = vector.extract_strided_slice %0 {offsets = [0, 2], sizes = [8, 1], strides = [1, 1]} : vector<8x8xf32> to vector<8x1xf32>
    %4 = vector.extract_strided_slice %0 {offsets = [0, 3], sizes = [8, 1], strides = [1, 1]} : vector<8x8xf32> to vector<8x1xf32>
    %5 = vector.extract_strided_slice %0 {offsets = [0, 4], sizes = [8, 1], strides = [1, 1]} : vector<8x8xf32> to vector<8x1xf32>
    %6 = vector.extract_strided_slice %0 {offsets = [0, 5], sizes = [8, 1], strides = [1, 1]} : vector<8x8xf32> to vector<8x1xf32>
    %7 = vector.extract_strided_slice %0 {offsets = [0, 6], sizes = [8, 1], strides = [1, 1]} : vector<8x8xf32> to vector<8x1xf32>
    %c0_1 = arith.constant 0 : index
    %c0_2 = arith.constant 0 : index
    %8 = vector.load %arg2[%c0_1, %c0_2] : memref<1x342xf32, #tpu.memory_space<vmem>>, vector<1x342xf32>
    %9 = vector.extract_strided_slice %8 {offsets = [0, 19], sizes = [1, 288], strides = [1, 1]} : vector<1x342xf32> to vector<1x288xf32>
    %c0_3 = arith.constant 0 : index
    %c0_4 = arith.constant 0 : index
    %10 = vector.load %arg3[%c0_3, %c0_4] : memref<8x216xbf16, #tpu.memory_space<vmem>>, vector<8x216xbf16>
    %c0_5 = arith.constant 0 : index
    %c0_6 = arith.constant 0 : index
    %11 = vector.load %arg4[%c0_5, %c0_6] : memref<8x216xbf16, #tpu.memory_space<vmem>>, vector<8x216xbf16>
    %cst = arith.constant 0.000000e+00 : f32
    %12 = vector.broadcast %cst : f32 to vector<8x342xf32>
    %cst_7 = arith.constant 0.000000e+00 : f32
    %13 = vector.broadcast %cst_7 : f32 to vector<8x19xf32>
    %cst_8 = arith.constant 0.000000e+00 : f32
    %14 = vector.broadcast %cst_8 : f32 to vector<8x35xf32>
    %c0_9 = arith.constant 0 : index
    %c0_10 = arith.constant 0 : index
    %c0_11 = arith.constant 0 : index
    %15 = vector.load %arg7[%c0_9, %c0_10, %c0_11] : memref<18x8x342xf32, #tpu.memory_space<vmem>>, vector<1x8x342xf32>
    %16 = vector.shape_cast %15 : vector<1x8x342xf32> to vector<8x342xf32>
    %17 = vector.shape_cast %12 : vector<8x342xf32> to vector<1x8x342xf32>
    tpu.vector_store %arg7[%c0_9, %c0_10, %c0_11], %17 {strides = array<i32>} : memref<18x8x342xf32, #tpu.memory_space<vmem>>, vector<1x8x342xf32>,
    %c17 = arith.constant 17 : index
    %c0_12 = arith.constant 0 : index
    %c0_13 = arith.constant 0 : index
    %18 = vector.load %arg7[%c17, %c0_12, %c0_13] : memref<18x8x342xf32, #tpu.memory_space<vmem>>, vector<1x8x342xf32>
    %19 = vector.shape_cast %18 : vector<1x8x342xf32> to vector<8x342xf32>
    %20 = vector.shape_cast %12 : vector<8x342xf32> to vector<1x8x342xf32>
    tpu.vector_store %arg7[%c17, %c0_12, %c0_13], %20 {strides = array<i32>} : memref<18x8x342xf32, #tpu.memory_space<vmem>>, vector<1x8x342xf32>,
    %c0_14 = arith.constant 0 : index
    %c0_15 = arith.constant 0 : index
    %c0_16 = arith.constant 0 : index
    %21 = vector.load %arg8[%c0_14, %c0_15, %c0_16] : memref<18x8x342xf32, #tpu.memory_space<vmem>>, vector<1x8x342xf32>
    %22 = vector.shape_cast %21 : vector<1x8x342xf32> to vector<8x342xf32>
    %23 = vector.shape_cast %12 : vector<8x342xf32> to vector<1x8x342xf32>
    tpu.vector_store %arg8[%c0_14, %c0_15, %c0_16], %23 {strides = array<i32>} : memref<18x8x342xf32, #tpu.memory_space<vmem>>, vector<1x8x342xf32>,
    %c17_17 = arith.constant 17 : index
    %c0_18 = arith.constant 0 : index
    %c0_19 = arith.constant 0 : index
    %24 = vector.load %arg8[%c17_17, %c0_18, %c0_19] : memref<18x8x342xf32, #tpu.memory_space<vmem>>, vector<1x8x342xf32>
    %25 = vector.shape_cast %24 : vector<1x8x342xf32> to vector<8x342xf32>
    %26 = vector.shape_cast %12 : vector<8x342xf32> to vector<1x8x342xf32>
    tpu.vector_store %arg8[%c17_17, %c0_18, %c0_19], %26 {strides = array<i32>} : memref<18x8x342xf32, #tpu.memory_space<vmem>>, vector<1x8x342xf32>,
    %c0_i32 = arith.constant 0 : i32
    %c16_i32 = arith.constant 16 : i32
    %27 = arith.addi %c0_i32, %c16_i32 : i32
    %c1_i32 = arith.constant 1 : i32
    scf.for %arg9 = %c0_i32 to %27 step %c1_i32  : i32 {
      %c1_i32_29 = arith.constant 1 : i32
      %30 = arith.addi %arg9, %c1_i32_29 : i32
      %c0_30 = arith.constant 0 : index
      %31 = arith.index_cast %30 : i32 to index
      %c0_31 = arith.constant 0 : index
      %c0_32 = arith.constant 0 : index
      %32 = vector.load %arg1[%c0_30, %31, %c0_31, %c0_32] : memref<1x18x8x342xf32, #tpu.memory_space<vmem>>, vector<1x1x8x342xf32>
      %33 = vector.shape_cast %32 : vector<1x1x8x342xf32> to vector<8x342xf32>
      %34 = vector.broadcast %1 : vector<8x1xf32> to vector<8x342xf32>
      %35 = arith.mulf %33, %34 : vector<8x342xf32>
      %36 = vector.broadcast %2 : vector<8x1xf32> to vector<8x342xf32>
      %37 = arith.addf %35, %36 : vector<8x342xf32>
      %cst_33 = arith.constant 0.000000e+00 : f32
      %38 = vector.broadcast %cst_33 : f32 to vector<8x342xf32>
      %39 = arith.cmpf ogt, %37, %38 : vector<8x342xf32>
      %40 = vector.broadcast %3 : vector<8x1xf32> to vector<8x342xf32>
      %41 = arith.mulf %40, %37 : vector<8x342xf32>
      %42 = arith.select %39, %37, %41 : vector<8x342xi1>, vector<8x342xf32>
      %43 = vector.broadcast %8 : vector<1x342xf32> to vector<8x342xf32>
      %44 = arith.mulf %42, %43 : vector<8x342xf32>
      %45 = arith.truncf %44 : vector<8x342xf32> to vector<8x342xbf16>
      %46 = arith.extf %45 : vector<8x342xbf16> to vector<8x342xf32>
      %c1_i32_34 = arith.constant 1 : i32
      %47 = arith.addi %arg9, %c1_i32_34 : i32
      %48 = arith.index_cast %47 : i32 to index
      %c0_35 = arith.constant 0 : index
      %c0_36 = arith.constant 0 : index
      %49 = vector.load %arg7[%48, %c0_35, %c0_36] : memref<18x8x342xf32, #tpu.memory_space<vmem>>, vector<1x8x342xf32>
      %50 = vector.shape_cast %49 : vector<1x8x342xf32> to vector<8x342xf32>
      %51 = vector.shape_cast %46 : vector<8x342xf32> to vector<1x8x342xf32>
      tpu.vector_store %arg7[%48, %c0_35, %c0_36], %51 {strides = array<i32>} : memref<18x8x342xf32, #tpu.memory_space<vmem>>, vector<1x8x342xf32>,
    }
    %c16_i32_20 = arith.constant 16 : i32
    %c0_i32_21 = arith.constant 0 : i32
    %c16_i32_22 = arith.constant 16 : i32
    %28 = arith.addi %c0_i32_21, %c16_i32_22 : i32
    %c1_i32_23 = arith.constant 1 : i32
    scf.for %arg9 = %c0_i32_21 to %28 step %c1_i32_23  : i32 {
      %30 = arith.index_cast %arg9 : i32 to index
      %c0_29 = arith.constant 0 : index
      %c0_30 = arith.constant 0 : index
      %31 = vector.load %arg7[%30, %c0_29, %c0_30] : memref<18x8x342xf32, #tpu.memory_space<vmem>>, vector<1x8x342xf32>
      %32 = vector.shape_cast %31 : vector<1x8x342xf32> to vector<8x342xf32>
      %c1_i32_31 = arith.constant 1 : i32
      %33 = arith.addi %arg9, %c1_i32_31 : i32
      %34 = arith.index_cast %33 : i32 to index
      %c0_32 = arith.constant 0 : index
      %c0_33 = arith.constant 0 : index
      %35 = vector.load %arg7[%34, %c0_32, %c0_33] : memref<18x8x342xf32, #tpu.memory_space<vmem>>, vector<1x8x342xf32>
      %36 = vector.shape_cast %35 : vector<1x8x342xf32> to vector<8x342xf32>
      %c2_i32 = arith.constant 2 : i32
      %37 = arith.addi %arg9, %c2_i32 : i32
      %38 = arith.index_cast %37 : i32 to index
      %c0_34 = arith.constant 0 : index
      %c0_35 = arith.constant 0 : index
      %39 = vector.load %arg7[%38, %c0_34, %c0_35] : memref<18x8x342xf32, #tpu.memory_space<vmem>>, vector<1x8x342xf32>
      %40 = vector.shape_cast %39 : vector<1x8x342xf32> to vector<8x342xf32>
      %41 = vector.extract_strided_slice %32 {offsets = [0, 0], sizes = [8, 288], strides = [1, 1]} : vector<8x342xf32> to vector<8x288xf32>
      %42 = vector.extract_strided_slice %36 {offsets = [0, 0], sizes = [8, 288], strides = [1, 1]} : vector<8x342xf32> to vector<8x288xf32>
      %43 = vector.extract_strided_slice %40 {offsets = [0, 0], sizes = [8, 288], strides = [1, 1]} : vector<8x342xf32> to vector<8x288xf32>
      %44 = vector.extract_strided_slice %32 {offsets = [0, 1], sizes = [8, 288], strides = [1, 1]} : vector<8x342xf32> to vector<8x288xf32>
      %45 = vector.extract_strided_slice %36 {offsets = [0, 1], sizes = [8, 288], strides = [1, 1]} : vector<8x342xf32> to vector<8x288xf32>
      %46 = vector.extract_strided_slice %40 {offsets = [0, 1], sizes = [8, 288], strides = [1, 1]} : vector<8x342xf32> to vector<8x288xf32>
      %47 = vector.extract_strided_slice %32 {offsets = [0, 2], sizes = [8, 288], strides = [1, 1]} : vector<8x342xf32> to vector<8x288xf32>
      %48 = vector.extract_strided_slice %36 {offsets = [0, 2], sizes = [8, 288], strides = [1, 1]} : vector<8x342xf32> to vector<8x288xf32>
      %49 = vector.extract_strided_slice %40 {offsets = [0, 2], sizes = [8, 288], strides = [1, 1]} : vector<8x342xf32> to vector<8x288xf32>
      %50 = vector.extract_strided_slice %32 {offsets = [0, 18], sizes = [8, 288], strides = [1, 1]} : vector<8x342xf32> to vector<8x288xf32>
      %51 = vector.extract_strided_slice %36 {offsets = [0, 18], sizes = [8, 288], strides = [1, 1]} : vector<8x342xf32> to vector<8x288xf32>
      %52 = vector.extract_strided_slice %40 {offsets = [0, 18], sizes = [8, 288], strides = [1, 1]} : vector<8x342xf32> to vector<8x288xf32>
      %53 = vector.extract_strided_slice %32 {offsets = [0, 19], sizes = [8, 288], strides = [1, 1]} : vector<8x342xf32> to vector<8x288xf32>
      %54 = vector.extract_strided_slice %36 {offsets = [0, 19], sizes = [8, 288], strides = [1, 1]} : vector<8x342xf32> to vector<8x288xf32>
      %55 = vector.extract_strided_slice %40 {offsets = [0, 19], sizes = [8, 288], strides = [1, 1]} : vector<8x342xf32> to vector<8x288xf32>
      %56 = vector.extract_strided_slice %32 {offsets = [0, 20], sizes = [8, 288], strides = [1, 1]} : vector<8x342xf32> to vector<8x288xf32>
      %57 = vector.extract_strided_slice %36 {offsets = [0, 20], sizes = [8, 288], strides = [1, 1]} : vector<8x342xf32> to vector<8x288xf32>
      %58 = vector.extract_strided_slice %40 {offsets = [0, 20], sizes = [8, 288], strides = [1, 1]} : vector<8x342xf32> to vector<8x288xf32>
      %59 = vector.extract_strided_slice %32 {offsets = [0, 36], sizes = [8, 288], strides = [1, 1]} : vector<8x342xf32> to vector<8x288xf32>
      %60 = vector.extract_strided_slice %36 {offsets = [0, 36], sizes = [8, 288], strides = [1, 1]} : vector<8x342xf32> to vector<8x288xf32>
      %61 = vector.extract_strided_slice %40 {offsets = [0, 36], sizes = [8, 288], strides = [1, 1]} : vector<8x342xf32> to vector<8x288xf32>
      %62 = vector.extract_strided_slice %32 {offsets = [0, 37], sizes = [8, 288], strides = [1, 1]} : vector<8x342xf32> to vector<8x288xf32>
      %63 = vector.extract_strided_slice %36 {offsets = [0, 37], sizes = [8, 288], strides = [1, 1]} : vector<8x342xf32> to vector<8x288xf32>
      %64 = vector.extract_strided_slice %40 {offsets = [0, 37], sizes = [8, 288], strides = [1, 1]} : vector<8x342xf32> to vector<8x288xf32>
      %65 = vector.extract_strided_slice %32 {offsets = [0, 38], sizes = [8, 288], strides = [1, 1]} : vector<8x342xf32> to vector<8x288xf32>
      %66 = vector.extract_strided_slice %36 {offsets = [0, 38], sizes = [8, 288], strides = [1, 1]} : vector<8x342xf32> to vector<8x288xf32>
      %67 = vector.extract_strided_slice %40 {offsets = [0, 38], sizes = [8, 288], strides = [1, 1]} : vector<8x342xf32> to vector<8x288xf32>
      %68 = tpu.concatenate %41, %42, %43, %44, %45, %46, %47, %48, %49, %50, %51, %52, %53, %54, %55, %56 in 0 : vector<8x288xf32>, vector<8x288xf32>, vector<8x288xf32>, vector<8x288xf32>, vector<8x288xf32>, vector<8x288xf32>, vector<8x288xf32>, vector<8x288xf32>, vector<8x288xf32>, vector<8x288xf32>, vector<8x288xf32>, vector<8x288xf32>, vector<8x288xf32>, vector<8x288xf32>, vector<8x288xf32>, vector<8x288xf32> -> vector<128x288xf32>
      %69 = tpu.concatenate %57, %58, %59, %60, %61, %62, %63, %64, %65, %66, %67 in 0 : vector<8x288xf32>, vector<8x288xf32>, vector<8x288xf32>, vector<8x288xf32>, vector<8x288xf32>, vector<8x288xf32>, vector<8x288xf32>, vector<8x288xf32>, vector<8x288xf32>, vector<8x288xf32>, vector<8x288xf32> -> vector<88x288xf32>
      %70 = tpu.concatenate %68, %69 in 0 : vector<128x288xf32>, vector<88x288xf32> -> vector<216x288xf32>
      %71 = arith.truncf %70 : vector<216x288xf32> to vector<216x288xbf16>
      %cst_36 = arith.constant dense<0.000000e+00> : vector<8x288xf32>
      %72 = tpu.matmul %10, %71, %cst_36 {dimension_numbers = #tpu.dot_dimension_numbers<[1], [0], [0], [1], [0, 0, 1, 1], [], []>} : vector<8x216xbf16>, vector<216x288xbf16>, vector<8x288xf32> -> vector<8x288xf32>
      %73 = vector.broadcast %4 : vector<8x1xf32> to vector<8x288xf32>
      %74 = arith.mulf %72, %73 : vector<8x288xf32>
      %75 = vector.broadcast %5 : vector<8x1xf32> to vector<8x288xf32>
      %76 = arith.addf %74, %75 : vector<8x288xf32>
      %cst_37 = arith.constant 0.000000e+00 : f32
      %77 = vector.broadcast %cst_37 : f32 to vector<8x288xf32>
      %78 = arith.cmpf ogt, %76, %77 : vector<8x288xf32>
      %79 = vector.broadcast %6 : vector<8x1xf32> to vector<8x288xf32>
      %80 = arith.mulf %79, %76 : vector<8x288xf32>
      %81 = arith.select %78, %76, %80 : vector<8x288xi1>, vector<8x288xf32>
      %82 = vector.broadcast %9 : vector<1x288xf32> to vector<8x288xf32>
      %83 = arith.mulf %81, %82 : vector<8x288xf32>
      %84 = arith.truncf %83 : vector<8x288xf32> to vector<8x288xbf16>
      %85 = arith.extf %84 : vector<8x288xbf16> to vector<8x288xf32>
      %86 = tpu.concatenate %13, %85, %14 in 1 : vector<8x19xf32>, vector<8x288xf32>, vector<8x35xf32> -> vector<8x342xf32>
      %c1_i32_38 = arith.constant 1 : i32
      %87 = arith.addi %arg9, %c1_i32_38 : i32
      %88 = arith.index_cast %87 : i32 to index
      %c0_39 = arith.constant 0 : index
      %c0_40 = arith.constant 0 : index
      %89 = vector.load %arg8[%88, %c0_39, %c0_40] : memref<18x8x342xf32, #tpu.memory_space<vmem>>, vector<1x8x342xf32>
      %90 = vector.shape_cast %89 : vector<1x8x342xf32> to vector<8x342xf32>
      %91 = vector.shape_cast %86 : vector<8x342xf32> to vector<1x8x342xf32>
      tpu.vector_store %arg8[%88, %c0_39, %c0_40], %91 {strides = array<i32>} : memref<18x8x342xf32, #tpu.memory_space<vmem>>, vector<1x8x342xf32>,
    }
    %c16_i32_24 = arith.constant 16 : i32
    %c0_i32_25 = arith.constant 0 : i32
    %c16_i32_26 = arith.constant 16 : i32
    %29 = arith.addi %c0_i32_25, %c16_i32_26 : i32
    %c1_i32_27 = arith.constant 1 : i32
    scf.for %arg9 = %c0_i32_25 to %29 step %c1_i32_27  : i32 {
      %30 = arith.index_cast %arg9 : i32 to index
      %c0_29 = arith.constant 0 : index
      %c0_30 = arith.constant 0 : index
      %31 = vector.load %arg8[%30, %c0_29, %c0_30] : memref<18x8x342xf32, #tpu.memory_space<vmem>>, vector<1x8x342xf32>
      %32 = vector.shape_cast %31 : vector<1x8x342xf32> to vector<8x342xf32>
      %c1_i32_31 = arith.constant 1 : i32
      %33 = arith.addi %arg9, %c1_i32_31 : i32
      %34 = arith.index_cast %33 : i32 to index
      %c0_32 = arith.constant 0 : index
      %c0_33 = arith.constant 0 : index
      %35 = vector.load %arg8[%34, %c0_32, %c0_33] : memref<18x8x342xf32, #tpu.memory_space<vmem>>, vector<1x8x342xf32>
      %36 = vector.shape_cast %35 : vector<1x8x342xf32> to vector<8x342xf32>
      %c2_i32 = arith.constant 2 : i32
      %37 = arith.addi %arg9, %c2_i32 : i32
      %38 = arith.index_cast %37 : i32 to index
      %c0_34 = arith.constant 0 : index
      %c0_35 = arith.constant 0 : index
      %39 = vector.load %arg8[%38, %c0_34, %c0_35] : memref<18x8x342xf32, #tpu.memory_space<vmem>>, vector<1x8x342xf32>
      %40 = vector.shape_cast %39 : vector<1x8x342xf32> to vector<8x342xf32>
      %41 = vector.extract_strided_slice %32 {offsets = [0, 0], sizes = [8, 288], strides = [1, 1]} : vector<8x342xf32> to vector<8x288xf32>
      %42 = vector.extract_strided_slice %36 {offsets = [0, 0], sizes = [8, 288], strides = [1, 1]} : vector<8x342xf32> to vector<8x288xf32>
      %43 = vector.extract_strided_slice %40 {offsets = [0, 0], sizes = [8, 288], strides = [1, 1]} : vector<8x342xf32> to vector<8x288xf32>
      %44 = vector.extract_strided_slice %32 {offsets = [0, 1], sizes = [8, 288], strides = [1, 1]} : vector<8x342xf32> to vector<8x288xf32>
      %45 = vector.extract_strided_slice %36 {offsets = [0, 1], sizes = [8, 288], strides = [1, 1]} : vector<8x342xf32> to vector<8x288xf32>
      %46 = vector.extract_strided_slice %40 {offsets = [0, 1], sizes = [8, 288], strides = [1, 1]} : vector<8x342xf32> to vector<8x288xf32>
      %47 = vector.extract_strided_slice %32 {offsets = [0, 2], sizes = [8, 288], strides = [1, 1]} : vector<8x342xf32> to vector<8x288xf32>
      %48 = vector.extract_strided_slice %36 {offsets = [0, 2], sizes = [8, 288], strides = [1, 1]} : vector<8x342xf32> to vector<8x288xf32>
      %49 = vector.extract_strided_slice %40 {offsets = [0, 2], sizes = [8, 288], strides = [1, 1]} : vector<8x342xf32> to vector<8x288xf32>
      %50 = vector.extract_strided_slice %32 {offsets = [0, 18], sizes = [8, 288], strides = [1, 1]} : vector<8x342xf32> to vector<8x288xf32>
      %51 = vector.extract_strided_slice %36 {offsets = [0, 18], sizes = [8, 288], strides = [1, 1]} : vector<8x342xf32> to vector<8x288xf32>
      %52 = vector.extract_strided_slice %40 {offsets = [0, 18], sizes = [8, 288], strides = [1, 1]} : vector<8x342xf32> to vector<8x288xf32>
      %53 = vector.extract_strided_slice %32 {offsets = [0, 19], sizes = [8, 288], strides = [1, 1]} : vector<8x342xf32> to vector<8x288xf32>
      %54 = vector.extract_strided_slice %36 {offsets = [0, 19], sizes = [8, 288], strides = [1, 1]} : vector<8x342xf32> to vector<8x288xf32>
      %55 = vector.extract_strided_slice %40 {offsets = [0, 19], sizes = [8, 288], strides = [1, 1]} : vector<8x342xf32> to vector<8x288xf32>
      %56 = vector.extract_strided_slice %32 {offsets = [0, 20], sizes = [8, 288], strides = [1, 1]} : vector<8x342xf32> to vector<8x288xf32>
      %57 = vector.extract_strided_slice %36 {offsets = [0, 20], sizes = [8, 288], strides = [1, 1]} : vector<8x342xf32> to vector<8x288xf32>
      %58 = vector.extract_strided_slice %40 {offsets = [0, 20], sizes = [8, 288], strides = [1, 1]} : vector<8x342xf32> to vector<8x288xf32>
      %59 = vector.extract_strided_slice %32 {offsets = [0, 36], sizes = [8, 288], strides = [1, 1]} : vector<8x342xf32> to vector<8x288xf32>
      %60 = vector.extract_strided_slice %36 {offsets = [0, 36], sizes = [8, 288], strides = [1, 1]} : vector<8x342xf32> to vector<8x288xf32>
      %61 = vector.extract_strided_slice %40 {offsets = [0, 36], sizes = [8, 288], strides = [1, 1]} : vector<8x342xf32> to vector<8x288xf32>
      %62 = vector.extract_strided_slice %32 {offsets = [0, 37], sizes = [8, 288], strides = [1, 1]} : vector<8x342xf32> to vector<8x288xf32>
      %63 = vector.extract_strided_slice %36 {offsets = [0, 37], sizes = [8, 288], strides = [1, 1]} : vector<8x342xf32> to vector<8x288xf32>
      %64 = vector.extract_strided_slice %40 {offsets = [0, 37], sizes = [8, 288], strides = [1, 1]} : vector<8x342xf32> to vector<8x288xf32>
      %65 = vector.extract_strided_slice %32 {offsets = [0, 38], sizes = [8, 288], strides = [1, 1]} : vector<8x342xf32> to vector<8x288xf32>
      %66 = vector.extract_strided_slice %36 {offsets = [0, 38], sizes = [8, 288], strides = [1, 1]} : vector<8x342xf32> to vector<8x288xf32>
      %67 = vector.extract_strided_slice %40 {offsets = [0, 38], sizes = [8, 288], strides = [1, 1]} : vector<8x342xf32> to vector<8x288xf32>
      %68 = tpu.concatenate %41, %42, %43, %44, %45, %46, %47, %48, %49, %50, %51, %52, %53, %54, %55, %56 in 0 : vector<8x288xf32>, vector<8x288xf32>, vector<8x288xf32>, vector<8x288xf32>, vector<8x288xf32>, vector<8x288xf32>, vector<8x288xf32>, vector<8x288xf32>, vector<8x288xf32>, vector<8x288xf32>, vector<8x288xf32>, vector<8x288xf32>, vector<8x288xf32>, vector<8x288xf32>, vector<8x288xf32>, vector<8x288xf32> -> vector<128x288xf32>
      %69 = tpu.concatenate %57, %58, %59, %60, %61, %62, %63, %64, %65, %66, %67 in 0 : vector<8x288xf32>, vector<8x288xf32>, vector<8x288xf32>, vector<8x288xf32>, vector<8x288xf32>, vector<8x288xf32>, vector<8x288xf32>, vector<8x288xf32>, vector<8x288xf32>, vector<8x288xf32>, vector<8x288xf32> -> vector<88x288xf32>
      %70 = tpu.concatenate %68, %69 in 0 : vector<128x288xf32>, vector<88x288xf32> -> vector<216x288xf32>
      %71 = arith.truncf %70 : vector<216x288xf32> to vector<216x288xbf16>
      %cst_36 = arith.constant dense<0.000000e+00> : vector<8x288xf32>
      %72 = tpu.matmul %11, %71, %cst_36 {dimension_numbers = #tpu.dot_dimension_numbers<[1], [0], [0], [1], [0, 0, 1, 1], [], []>} : vector<8x216xbf16>, vector<216x288xbf16>, vector<8x288xf32> -> vector<8x288xf32>
      %c1_i32_37 = arith.constant 1 : i32
      %73 = arith.addi %arg9, %c1_i32_37 : i32
      %c0_38 = arith.constant 0 : index
      %74 = arith.index_cast %73 : i32 to index
      %c0_39 = arith.constant 0 : index
      %c0_40 = arith.constant 0 : index
      %75 = vector.load %arg1[%c0_38, %74, %c0_39, %c0_40] : memref<1x18x8x342xf32, #tpu.memory_space<vmem>>, vector<1x1x8x342xf32>
      %76 = vector.shape_cast %75 : vector<1x1x8x342xf32> to vector<8x342xf32>
      %77 = vector.extract_strided_slice %76 {offsets = [0, 19], sizes = [8, 288], strides = [1, 1]} : vector<8x342xf32> to vector<8x288xf32>
      %78 = vector.broadcast %7 : vector<8x1xf32> to vector<8x288xf32>
      %79 = arith.addf %72, %78 : vector<8x288xf32>
      %80 = arith.addf %79, %77 : vector<8x288xf32>
      %c0_41 = arith.constant 0 : index
      %81 = arith.index_cast %arg9 : i32 to index
      %c0_42 = arith.constant 0 : index
      %c0_43 = arith.constant 0 : index
      %82 = vector.load %arg6[%c0_41, %81, %c0_42, %c0_43] : memref<1x16x8x288xf32, #tpu.memory_space<vmem>>, vector<1x1x8x288xf32>
      %83 = vector.shape_cast %82 : vector<1x1x8x288xf32> to vector<8x288xf32>
      %84 = vector.shape_cast %80 : vector<8x288xf32> to vector<1x1x8x288xf32>
      tpu.vector_store %arg6[%c0_41, %81, %c0_42, %c0_43], %84 {strides = array<i32>} : memref<1x16x8x288xf32, #tpu.memory_space<vmem>>, vector<1x1x8x288xf32>,
    }
    %c16_i32_28 = arith.constant 16 : i32
    return
  }
  func.func @transform_0(%arg0: i32) -> (i32, i32, i32, i32) {
    %c0_i32 = arith.constant 0 : i32
    %c0_i32_0 = arith.constant 0 : i32
    %c0_i32_1 = arith.constant 0 : i32
    %c0_i32_2 = arith.constant 0 : i32
    return %arg0, %c0_i32, %c0_i32_0, %c0_i32_1 : i32, i32, i32, i32
  }
  func.func @transform_1(%arg0: i32) -> (i32, i32) {
    %c0_i32 = arith.constant 0 : i32
    %c0_i32_0 = arith.constant 0 : i32
    %c0_i32_1 = arith.constant 0 : i32
    return %c0_i32, %c0_i32_0 : i32, i32
  }
  func.func @transform_2(%arg0: i32) -> (i32, i32) {
    %c0_i32 = arith.constant 0 : i32
    %c0_i32_0 = arith.constant 0 : i32
    %c0_i32_1 = arith.constant 0 : i32
    return %c0_i32, %c0_i32_0 : i32, i32
  }
  func.func @transform_3(%arg0: i32) -> (i32, i32) {
    %c0_i32 = arith.constant 0 : i32
    %c0_i32_0 = arith.constant 0 : i32
    %c0_i32_1 = arith.constant 0 : i32
    return %c0_i32, %c0_i32_0 : i32, i32
  }
  func.func @transform_4(%arg0: i32) -> (i32, i32) {
    %c0_i32 = arith.constant 0 : i32
    %c0_i32_0 = arith.constant 0 : i32
    %c0_i32_1 = arith.constant 0 : i32
    return %c0_i32, %c0_i32_0 : i32, i32
  }
  func.func @transform_5(%arg0: i32) -> (i32, i32, i32, i32) {
    %c0_i32 = arith.constant 0 : i32
    %c0_i32_0 = arith.constant 0 : i32
    %c0_i32_1 = arith.constant 0 : i32
    %c0_i32_2 = arith.constant 0 : i32
    return %arg0, %c0_i32, %c0_i32_0, %c0_i32_1 : i32, i32, i32, i32
  }
}

</mosaic_0001>

<llo_original>
// kernel: dualres_forward.1
$region0: #{dualres_forward.1}
  #allocation0 [shape = 'u32[]', space=smem, size = 0x4, offset = 0x4, fixed_abs, tag = 'smem constant byte address 0x4 - core index']
  #allocation1 [shape = 'u32[144,128]{1,0:T(1,128)}', space=vmem, size = 0x12000, scoped, tag = 'internal scratch']
  #allocation2 [shape = 'f32[18,8,342]{2,1,0:T(8,128)}', space=vmem, size = 0x36000, scoped, tag = 'scratch operand']
  #allocation3 [shape = 'f32[18,8,342]{2,1,0:T(8,128)}', space=vmem, size = 0x36000, scoped, tag = 'scratch operand']
  %s0 = inlined_call_operand.vmem [shape: f32[2,18,8,342], index: 0, kind: input, shape index: {}]
  %s1 = inlined_call_operand.vmem [shape: f32[1,342], index: 1, kind: input, shape index: {}]
  %s2 = inlined_call_operand.vmem [shape: bf16[8,216], index: 2, kind: input, shape index: {}]
  %s3 = inlined_call_operand.vmem [shape: bf16[8,216], index: 3, kind: input, shape index: {}]
  %s4 = inlined_call_operand.vmem [shape: f32[8,8], index: 4, kind: input, shape index: {}]
  %s5 = inlined_call_operand.vmem [shape: f32[2,16,8,288], index: 5, kind: output, shape index: {}]
  %s6 = sld [smem:[#allocation0]]
  $region74: #{dualres_forward.1} parent=0
    _
  %s8 = ssub.s32 1, %s6
  %s9 = scalar_select 0, %s8, %s6
  loop: start=0, step=1, limit=4
  $region2: #{dualres_forward.1} parent=0 // loop_pre_header
    _
  $region3: #{dualres_forward.1} parent=0 // loop_header
    %s11 = sphi 0, %s15
    %p12 = scmp.ge.s32.totalorder %s11, 4
    %s21 = sphi 0, %s23
    %s24 = sphi 0, %s21
    %s25 = sphi 0, %s24
    %s41 = sphi 0, %s25
    %s45 = sphi 0, %s45
    %s47 = sphi 0, %s45
    %s48 = sphi 0, %s47
    %s62 = sphi 0, %s48
    %s66 = sphi 0, %s66
    %s68 = sphi 0, %s66
    %s69 = sphi 0, %s68
    %s83 = sphi 0, %s69
    %s87 = sphi 0, %s87
    %s89 = sphi 0, %s87
    %s90 = sphi 0, %s89
    %s104 = sphi 0, %s90
    %s108 = sphi 0, %s108
    %s110 = sphi 0, %s108
    %s111 = sphi 0, %s110
    %s125 = sphi 0, %s111
    %s131 = sphi 0, %s133
    %s134 = sphi 0, %s131
    %s135 = sphi 0, %s134
    %s151 = sphi 0, %s135
  $region4: #{dualres_forward.1} parent=0 // loop_header_branch
    %14 = sbr.rel (%p12) target = $region8
  $region5: #{dualres_forward.1} parent=0 // loop_body
    %s16 = ssub.s32 %s11, 1
    %s17 = ssub.s32 %s11, 2
    %s18 = sadd.s32 %s11, 1
    %s19 = ssub.s32 %s11, %s18
    %p20 = scmp.eq.s32.totalorder %s19, 0
    %s22 = sadd.s32 %s21, 1
    %s23 = scalar_select %p20, %s21, %s22
    %p26 = pneg %p20
    %p27 = scmp.eq.s32.totalorder %s11, 1
    %p28 = por %p26, %p27
    %p29 = scmp.ne.s32.totalorder %s21, %s24
    %p30 = scmp.eq.s32.totalorder %s11, 0
    %p31 = por %p29, %p30
    %p32 = scmp.ne.s32.totalorder %s21, %s24
    %p33 = scmp.eq.s32.totalorder %s16, 1
    %p34 = por %p32, %p33
    %p35 = scmp.ne.s32.totalorder %s24, %s25
    %p36 = scmp.eq.s32.totalorder %s16, 0
    %p37 = por %p35, %p36
    %p38 = scmp.ne.s32.totalorder %s24, %s25
    %p39 = scmp.eq.s32.totalorder %s17, 1
    %p40 = por %p38, %p39
    %p42 = scmp.ne.s32.totalorder %s25, %s41
    %p43 = scmp.eq.s32.totalorder %s17, 0
    %p44 = por %p42, %p43
    %s46 = sadd.s32 %s45, 1
    %p49 = scmp.eq.s32.totalorder %s11, 1
    %p50 = scmp.ne.s32.totalorder %s45, %s47
    %p51 = scmp.eq.s32.totalorder %s11, 0
    %p52 = por %p50, %p51
    %p53 = scmp.ne.s32.totalorder %s45, %s47
    %p54 = scmp.eq.s32.totalorder %s16, 1
    %p55 = por %p53, %p54
    %p56 = scmp.ne.s32.totalorder %s47, %s48
    %p57 = scmp.eq.s32.totalorder %s16, 0
    %p58 = por %p56, %p57
    %p59 = scmp.ne.s32.totalorder %s47, %s48
    %p60 = scmp.eq.s32.totalorder %s17, 1
    %p61 = por %p59, %p60
    %p63 = scmp.ne.s32.totalorder %s48, %s62
    %p64 = scmp.eq.s32.totalorder %s17, 0
    %p65 = por %p63, %p64
    %s67 = sadd.s32 %s66, 1
    %p70 = scmp.eq.s32.totalorder %s11, 1
    %p71 = scmp.ne.s32.totalorder %s66, %s68
    %p72 = scmp.eq.s32.totalorder %s11, 0
    %p73 = por %p71, %p72
    %p74 = scmp.ne.s32.totalorder %s66, %s68
    %p75 = scmp.eq.s32.totalorder %s16, 1
    %p76 = por %p74, %p75
    %p77 = scmp.ne.s32.totalorder %s68, %s69
    %p78 = scmp.eq.s32.totalorder %s16, 0
    %p79 = por %p77, %p78
    %p80 = scmp.ne.s32.totalorder %s68, %s69
    %p81 = scmp.eq.s32.totalorder %s17, 1
    %p82 = por %p80, %p81
    %p84 = scmp.ne.s32.totalorder %s69, %s83
    %p85 = scmp.eq.s32.totalorder %s17, 0
    %p86 = por %p84, %p85
    %s88 = sadd.s32 %s87, 1
    %p91 = scmp.eq.s32.totalorder %s11, 1
    %p92 = scmp.ne.s32.totalorder %s87, %s89
    %p93 = scmp.eq.s32.totalorder %s11, 0
    %p94 = por %p92, %p93
    %p95 = scmp.ne.s32.totalorder %s87, %s89
    %p96 = scmp.eq.s32.totalorder %s16, 1
    %p97 = por %p95, %p96
    %p98 = scmp.ne.s32.totalorder %s89, %s90
    %p99 = scmp.eq.s32.totalorder %s16, 0
    %p100 = por %p98, %p99
    %p101 = scmp.ne.s32.totalorder %s89, %s90
    %p102 = scmp.eq.s32.totalorder %s17, 1
    %p103 = por %p101, %p102
    %p105 = scmp.ne.s32.totalorder %s90, %s104
    %p106 = scmp.eq.s32.totalorder %s17, 0
    %p107 = por %p105, %p106
    %s109 = sadd.s32 %s108, 1
    %p112 = scmp.eq.s32.totalorder %s11, 1
    %p113 = scmp.ne.s32.totalorder %s108, %s110
    %p114 = scmp.eq.s32.totalorder %s11, 0
    %p115 = por %p113, %p114
    %p116 = scmp.ne.s32.totalorder %s108, %s110
    %p117 = scmp.eq.s32.totalorder %s16, 1
    %p118 = por %p116, %p117
    %p119 = scmp.ne.s32.totalorder %s110, %s111
    %p120 = scmp.eq.s32.totalorder %s16, 0
    %p121 = por %p119, %p120
    %p122 = scmp.ne.s32.totalorder %s110, %s111
    %p123 = scmp.eq.s32.totalorder %s17, 1
    %p124 = por %p122, %p123
    %p126 = scmp.ne.s32.totalorder %s111, %s125
    %p127 = scmp.eq.s32.totalorder %s17, 0
    %p128 = por %p126, %p127
    %s129 = ssub.s32 %s11, %s18
    %p130 = scmp.eq.s32.totalorder %s129, 0
    %s132 = sadd.s32 %s131, 1
    %s133 = scalar_select %p130, %s131, %s132
    %p136 = pneg %p130
    %p137 = scmp.eq.s32.totalorder %s11, 1
    %p138 = por %p136, %p137
    %p139 = scmp.ne.s32.totalorder %s131, %s134
    %p140 = scmp.eq.s32.totalorder %s11, 0
    %p141 = por %p139, %p140
    %p142 = scmp.ne.s32.totalorder %s131, %s134
    %p143 = scmp.eq.s32.totalorder %s16, 1
    %p144 = por %p142, %p143
    %p145 = scmp.ne.s32.totalorder %s134, %s135
    %p146 = scmp.eq.s32.totalorder %s16, 0
    %p147 = por %p145, %p146
    %p148 = scmp.ne.s32.totalorder %s134, %s135
    %p149 = scmp.eq.s32.totalorder %s17, 1
    %p150 = por %p148, %p149
    %p152 = scmp.ne.s32.totalorder %s135, %s151
    %p153 = scmp.eq.s32.totalorder %s17, 0
    %p154 = por %p152, %p153
    %p155 = scmp.le.s32.totalorder 1, %s11
    %p156 = scmp.lt.s32.totalorder %s11, 3
    %p157 = pnand %p155, %p156
    %p158 = pneg %p157
    // Predicated region
    $region9: #{dualres_forward.1} parent=5 // pred_check
      _
    $region10: #{dualres_forward.1} parent=5 // pred_check_branch
      %160 = sbr.rel (%p157) target = $region12
    $region11: #{dualres_forward.1} parent=5 // pred_region
      %s161 = ssub.s32 %s11, 1
      // Predicated region
      $region13: #{dualres_forward.1} parent=11 // pred_check
        %p162 = pneg %p58
      $region14: #{dualres_forward.1} parent=11 // pred_check_branch
        %164 = sbr.rel (%p162) target = $region16
      $region15: #{dualres_forward.1} parent=11 // pred_region
        _
      $region16: #{dualres_forward.1} parent=11 // pred_fallthru
        _
      // Predicated region
      $region17: #{dualres_forward.1} parent=11 // pred_check
        %p165 = pneg %p79
      $region18: #{dualres_forward.1} parent=11 // pred_check_branch
        %167 = sbr.rel (%p165) target = $region20
      $region19: #{dualres_forward.1} parent=11 // pred_region
        _
      $region20: #{dualres_forward.1} parent=11 // pred_fallthru
        _
      // Predicated region
      $region21: #{dualres_forward.1} parent=11 // pred_check
        %p168 = pneg %p100
      $region22: #{dualres_forward.1} parent=11 // pred_check_branch
        %170 = sbr.rel (%p168) target = $region24
      $region23: #{dualres_forward.1} parent=11 // pred_region
        _
      $region24: #{dualres_forward.1} parent=11 // pred_fallthru
        _
      // Predicated region
      $region25: #{dualres_forward.1} parent=11 // pred_check
        %p171 = pneg %p121
      $region26: #{dualres_forward.1} parent=11 // pred_check_branch
        %173 = sbr.rel (%p171) target = $region28
      $region27: #{dualres_forward.1} parent=11 // pred_region
        _
      $region28: #{dualres_forward.1} parent=11 // pred_fallthru
        _
    $region12: #{dualres_forward.1} parent=5 // pred_fallthru
      _
    %p174 = scmp.lt.s32.totalorder %s11, 2
    // Predicated region
    $region29: #{dualres_forward.1} parent=5 // pred_check
      %p175 = pneg %p174
    $region30: #{dualres_forward.1} parent=5 // pred_check_branch
      %177 = sbr.rel (%p175) target = $region32
    $region31: #{dualres_forward.1} parent=5 // pred_region
      // Predicated region
      $region33: #{dualres_forward.1} parent=31 // pred_check
        %p178 = pneg %p31
      $region34: #{dualres_forward.1} parent=31 // pred_check_branch
        %180 = sbr.rel (%p178) target = $region36
      $region35: #{dualres_forward.1} parent=31 // pred_region
        %p181 = scmp.lt.s32.totalorder %s11, 1
        %s182 = scalar_select %p181, %s11, 1
        %s183 = smul.addr %s182, 54
        %s184 = smul.addr %s183, 8
        %s185 = scalar_lea.vmem %s0, %s184
      $region36: #{dualres_forward.1} parent=31 // pred_fallthru
        _
    $region32: #{dualres_forward.1} parent=5 // pred_fallthru
      _
    %p186 = scmp.le.s32.totalorder 1, %s11
    %p187 = scmp.lt.s32.totalorder %s11, 3
    %p188 = pnand %p186, %p187
    %p189 = pneg %p188
    // Predicated region
    $region37: #{dualres_forward.1} parent=5 // pred_check
      _
    $region38: #{dualres_forward.1} parent=5 // pred_check_branch
      %191 = sbr.rel (%p188) target = $region40
    $region39: #{dualres_forward.1} parent=5 // pred_region
      %s192 = ssub.s32 %s11, 1
      %p193 = scmp.lt.s32.totalorder %s16, 1
      %s194 = scalar_select %p193, %s16, 1
      %s195 = smul.addr %s194, 54
      %s196 = smul.addr %s195, 8
      %s197 = scalar_lea.vmem %s0, %s196
      %p198 = pneg %p37
      %p199 = pneg %p34
      %p200 = pneg %p58
      %p201 = pneg %p55
      %p202 = pneg %p79
      %p203 = pneg %p76
      %p204 = pneg %p100
      %p205 = pneg %p97
      %p206 = pneg %p121
      %p207 = pneg %p118
      %p208 = pneg %p147
      %p209 = pneg %p144
      %p210 = scmp.lt.s32.totalorder %s16, 1
      %s211 = scalar_select %p210, %s16, 1
      %s212 = smul.addr %s211, 48
      %s213 = smul.addr %s212, 8
      %s214 = scalar_lea.vmem %s5, %s213
      %p215 = scmp.lt.s32.totalorder %s16, 1
      %s216 = scalar_select %p215, %s16, 1
      %s217 = smul.addr %s216, 54
      %s218 = smul.addr %s217, 8
      %s219 = scalar_lea.vmem %s0, %s218
      %p220 = scmp.lt.s32.totalorder %s16, 1
      %s221 = scalar_select %p220, %s16, 1
      %s222 = smul.addr %s221, 48
      %s223 = smul.addr %s222, 8
      %s224 = scalar_lea.vmem %s5, %s223
      %v226 = vld [vmem:[%s4] sm:$0xff]
      %v227 = vld [vmem:[%s1] sm:$0x7]
      %v228 = vld [vmem:[%s2] sm:$0xff]
      %v229 = vld [vmem:[%s3] sm:$0xff]
      %230 = vst [vmem:[#allocation2] sm:$0xff] 0.0
      %231 = vst [vmem:[#allocation2 + $0x8] sm:$0xff] 0.0
      %vm232 = vcmask 703488
      %233 = vst.msk [vmem:[#allocation2 + $0x10] sm:$0xff] %vm232, 0.0
      %s234 = scalar_lea.vmem [#allocation2], 408
      %235 = vst [vmem:[%s234] sm:$0xff] 0.0
      %236 = vst [vmem:[%s234 + $0x8] sm:$0xff] 0.0
      %237 = vst.msk [vmem:[%s234 + $0x10] sm:$0xff] %vm232, 0.0
      %238 = vst [vmem:[#allocation3] sm:$0xff] 0.0
      %239 = vst [vmem:[#allocation3 + $0x8] sm:$0xff] 0.0
      %240 = vst.msk [vmem:[#allocation3 + $0x10] sm:$0xff] %vm232, 0.0
      %s241 = scalar_lea.vmem [#allocation3], 408
      %242 = vst [vmem:[%s241] sm:$0xff] 0.0
      %243 = vst [vmem:[%s241 + $0x8] sm:$0xff] 0.0
      %244 = vst.msk [vmem:[%s241 + $0x10] sm:$0xff] %vm232, 0.0
      loop: start=0, step=1, limit=16
      $region41: #{dualres_forward.1} parent=39 // loop_pre_header
        _
      $region42: #{dualres_forward.1} parent=39 // loop_header
        %s246 = sphi 0, %s250
        %p247 = scmp.ge.s32.totalorder %s246, 16
      $region43: #{dualres_forward.1} parent=39 // loop_header_branch
        %249 = sbr.rel (%p247) target = $region47
      $region44: #{dualres_forward.1} parent=39 // loop_body
        %s251 = sadd.s32 %s246, 1
        %s252 = smul.u32 %s251, 3
        %s253 = smul.addr %s252, 8
        %s254 = scalar_lea.vmem %s219, %s253
        %v255 = vld [vmem:[%s254] sm:$0xff]
        %v256 = vld [vmem:[%s254 + $0x8] sm:$0xff]
        %v257 = vld [vmem:[%s254 + $0x10] sm:$0xff]
        %259 = vset.pattern.permute.xlu0 0
        %260 = vperm.xlu0 %259, %v226
        %v261 = vpop.permute.xlu0 %260
        %v263 = vmul.f32 %v255, %v261
        %v264 = vmul.f32 %v256, %v261
        %v265 = vmul.f32 %v257, %v261
        %266 = vset.pattern.permute.xlu0 1
        %267 = vperm.xlu0 %266, %v226
        %v268 = vpop.permute.xlu0 %267
        %v270 = vadd.f32 %v263, %v268
        %v271 = vadd.f32 %v264, %v268
        %v272 = vadd.f32 %v265, %v268
        %vm273 = vcmp.gt.f32.partialorder %v270, 0.0
        %vm274 = vcmp.gt.f32.partialorder %v271, 0.0
        %vm275 = vcmp.gt.f32.partialorder %v272, 0.0
        %276 = vset.pattern.permute.xlu0 2
        %277 = vperm.xlu0 %276, %v226
        %v278 = vpop.permute.xlu0 %277
        %v280 = vmul.f32 %v278, %v270
        %v281 = vmul.f32 %v278, %v271
        %v282 = vmul.f32 %v278, %v272
        %v283 = vsel %vm273, %v270, %v280
        %v284 = vsel %vm274, %v271, %v281
        %v285 = vsel %vm275, %v272, %v282
        %v287 = vlaneseq
        %v288 = vshrl.u32 %v287, 7
        %v289 = vsub.s32 0, %v288
        %v290 = vrot.slane %v227, %v289
        %v291 = vlaneseq
        %v292 = vshrl.u32 %v291, 7
        %v293 = vsub.s32 1, %v292
        %v294 = vrot.slane %v227, %v293
        %v295 = vlaneseq
        %v296 = vshrl.u32 %v295, 7
        %v297 = vsub.s32 2, %v296
        %v298 = vrot.slane %v227, %v297
        %v302 = vmul.f32 %v283, %v290
        %v303 = vmul.f32 %v284, %v294
        %v304 = vmul.f32 %v285, %v298
        %v305 = vpack.c.bf16 %v302, %v302
        %v306 = vpack.c.bf16 %v303, %v303
        %v307 = vpack.c.bf16 %v304, %v304
        %v308 = vunpack.c.l.bf16 %v305
        %v309 = vunpack.c.l.bf16 %v306
        %v310 = vunpack.c.l.bf16 %v307
        %s311 = smul.addr %s252, 8
        %s312 = scalar_lea.vmem [#allocation2], %s311
        %313 = vst [vmem:[%s312] sm:$0xff] %v308
        %314 = vst [vmem:[%s312 + $0x8] sm:$0xff] %v309
        %315 = vst.msk [vmem:[%s312 + $0x10] sm:$0xff] %vm232, %v310
      $region45: #{dualres_forward.1} parent=39 // loop_footer
        %s250 = sadd.s32 1, %s246
      $region46: #{dualres_forward.1} parent=39 // loop_footer_branch
        %245 = sbr.rel target = $region42
      $region47: #{dualres_forward.1} parent=39 // loop_exit
        _
      loop: start=0, step=1, limit=16
      $region48: #{dualres_forward.1} parent=39 // loop_pre_header
        _
      $region49: #{dualres_forward.1} parent=39 // loop_header
        %s317 = sphi 0, %s321
        %p318 = scmp.ge.s32.totalorder %s317, 16
      $region50: #{dualres_forward.1} parent=39 // loop_header_branch
        %320 = sbr.rel (%p318) target = $region54
      $region51: #{dualres_forward.1} parent=39 // loop_body
        %s322 = smul.u32 %s317, 3
        %s323 = smul.addr %s322, 8
        %s324 = scalar_lea.vmem [#allocation2], %s323
        %v325 = vld [vmem:[%s324] sm:$0xff]
        %v326 = vld [vmem:[%s324 + $0x8] sm:$0xff]
        %v327 = vld [vmem:[%s324 + $0x10] sm:$0xff]
        %s328 = sadd.s32 %s317, 1
        %s329 = smul.u32 %s328, 3
        %s330 = smul.addr %s329, 8
        %s331 = scalar_lea.vmem [#allocation2], %s330
        %v332 = vld [vmem:[%s331] sm:$0xff]
        %v333 = vld [vmem:[%s331 + $0x8] sm:$0xff]
        %v334 = vld [vmem:[%s331 + $0x10] sm:$0xff]
        %s335 = sadd.s32 %s317, 2
        %s336 = smul.u32 %s335, 3
        %s337 = smul.addr %s336, 8
        %s338 = scalar_lea.vmem [#allocation2], %s337
        %v339 = vld [vmem:[%s338] sm:$0xff]
        %v340 = vld [vmem:[%s338 + $0x8] sm:$0xff]
        %v341 = vld [vmem:[%s338 + $0x10] sm:$0xff]
        %345 = vrot.lane.b32.xlu0 %v325, 127
        %v346 = vpop.permute.xlu0 %345
        %347 = vrot.lane.b32.xlu0 %v326, 127
        %v348 = vpop.permute.xlu0 %347
        %349 = vrot.lane.b32.xlu0 %v327, 127
        %v350 = vpop.permute.xlu0 %349
        %vm351 = vcmask 1039360
        %v352 = vsel %vm351, %v346, %v348
        %v353 = vsel %vm351, %v348, %v350
        %360 = vrot.lane.b32.xlu0 %v332, 127
        %v361 = vpop.permute.xlu0 %360
        %362 = vrot.lane.b32.xlu0 %v333, 127
        %v363 = vpop.permute.xlu0 %362
        %364 = vrot.lane.b32.xlu0 %v334, 127
        %v365 = vpop.permute.xlu0 %364
        %v366 = vsel %vm351, %v361, %v363
        %v367 = vsel %vm351, %v363, %v365
        %374 = vrot.lane.b32.xlu0 %v339, 127
        %v375 = vpop.permute.xlu0 %374
        %376 = vrot.lane.b32.xlu0 %v340, 127
        %v377 = vpop.permute.xlu0 %376
        %378 = vrot.lane.b32.xlu0 %v341, 127
        %v379 = vpop.permute.xlu0 %378
        %v380 = vsel %vm351, %v375, %v377
        %v381 = vsel %vm351, %v377, %v379
        %385 = vrot.lane.b32.xlu0 %v325, 126
        %v386 = vpop.permute.xlu0 %385
        %387 = vrot.lane.b32.xlu0 %v326, 126
        %v388 = vpop.permute.xlu0 %387
        %389 = vrot.lane.b32.xlu0 %v327, 126
        %v390 = vpop.permute.xlu0 %389
        %vm391 = vcmask 1031168
        %v392 = vsel %vm391, %v386, %v388
        %v393 = vsel %vm391, %v388, %v390
        %397 = vrot.lane.b32.xlu0 %v332, 126
        %v398 = vpop.permute.xlu0 %397
        %399 = vrot.lane.b32.xlu0 %v333, 126
        %v400 = vpop.permute.xlu0 %399
        %401 = vrot.lane.b32.xlu0 %v334, 126
        %v402 = vpop.permute.xlu0 %401
        %v403 = vsel %vm391, %v398, %v400
        %v404 = vsel %vm391, %v400, %v402
        %408 = vrot.lane.b32.xlu0 %v339, 126
        %v409 = vpop.permute.xlu0 %408
        %410 = vrot.lane.b32.xlu0 %v340, 126
        %v411 = vpop.permute.xlu0 %410
        %412 = vrot.lane.b32.xlu0 %v341, 126
        %v413 = vpop.permute.xlu0 %412
        %v414 = vsel %vm391, %v409, %v411
        %v415 = vsel %vm391, %v411, %v413
        %419 = vrot.lane.b32.xlu0 %v325, 110
        %v420 = vpop.permute.xlu0 %419
        %421 = vrot.lane.b32.xlu0 %v326, 110
        %v422 = vpop.permute.xlu0 %421
        %423 = vrot.lane.b32.xlu0 %v327, 110
        %v424 = vpop.permute.xlu0 %423
        %vm425 = vcmask 900096
        %v426 = vsel %vm425, %v420, %v422
        %v427 = vsel %vm425, %v422, %v424
        %431 = vrot.lane.b32.xlu0 %v332, 110
        %v432 = vpop.permute.xlu0 %431
        %433 = vrot.lane.b32.xlu0 %v333, 110
        %v434 = vpop.permute.xlu0 %433
        %435 = vrot.lane.b32.xlu0 %v334, 110
        %v436 = vpop.permute.xlu0 %435
        %v437 = vsel %vm425, %v432, %v434
        %v438 = vsel %vm425, %v434, %v436
        %442 = vrot.lane.b32.xlu0 %v339, 110
        %v443 = vpop.permute.xlu0 %442
        %444 = vrot.lane.b32.xlu0 %v340, 110
        %v445 = vpop.permute.xlu0 %444
        %446 = vrot.lane.b32.xlu0 %v341, 110
        %v447 = vpop.permute.xlu0 %446
        %v448 = vsel %vm425, %v443, %v445
        %v449 = vsel %vm425, %v445, %v447
        %453 = vrot.lane.b32.xlu0 %v325, 109
        %v454 = vpop.permute.xlu0 %453
        %455 = vrot.lane.b32.xlu0 %v326, 109
        %v456 = vpop.permute.xlu0 %455
        %457 = vrot.lane.b32.xlu0 %v327, 109
        %v458 = vpop.permute.xlu0 %457
        %vm459 = vcmask 891904
        %v460 = vsel %vm459, %v454, %v456
        %v461 = vsel %vm459, %v456, %v458
        %465 = vrot.lane.b32.xlu0 %v332, 109
        %v466 = vpop.permute.xlu0 %465
        %467 = vrot.lane.b32.xlu0 %v333, 109
        %v468 = vpop.permute.xlu0 %467
        %469 = vrot.lane.b32.xlu0 %v334, 109
        %v470 = vpop.permute.xlu0 %469
        %v471 = vsel %vm459, %v466, %v468
        %v472 = vsel %vm459, %v468, %v470
        %476 = vrot.lane.b32.xlu0 %v339, 109
        %v477 = vpop.permute.xlu0 %476
        %478 = vrot.lane.b32.xlu0 %v340, 109
        %v479 = vpop.permute.xlu0 %478
        %480 = vrot.lane.b32.xlu0 %v341, 109
        %v481 = vpop.permute.xlu0 %480
        %v482 = vsel %vm459, %v477, %v479
        %v483 = vsel %vm459, %v479, %v481
        %487 = vrot.lane.b32.xlu0 %v325, 108
        %v488 = vpop.permute.xlu0 %487
        %489 = vrot.lane.b32.xlu0 %v326, 108
        %v490 = vpop.permute.xlu0 %489
        %491 = vrot.lane.b32.xlu0 %v327, 108
        %v492 = vpop.permute.xlu0 %491
        %vm493 = vcmask 883712
        %v494 = vsel %vm493, %v488, %v490
        %v495 = vsel %vm493, %v490, %v492
        %499 = vrot.lane.b32.xlu0 %v325, 112
        %v500 = vpop.permute.xlu0 %499
        %501 = vrot.lane.b32.xlu0 %v326, 112
        %v502 = vpop.permute.xlu0 %501
        %503 = vrot.lane.b32.xlu0 %v327, 112
        %v504 = vpop.permute.xlu0 %503
        %vm505 = vcmask 916480
        %v506 = vsel %vm505, %v500, %v502
        %v507 = vsel %vm505, %v502, %v504
        %508 = vrot.lane.b32.xlu0 %v332, 112
        %v509 = vpop.permute.xlu0 %508
        %510 = vrot.lane.b32.xlu0 %v333, 112
        %v511 = vpop.permute.xlu0 %510
        %512 = vrot.lane.b32.xlu0 %v334, 112
        %v513 = vpop.permute.xlu0 %512
        %v514 = vsel %vm505, %v509, %v511
        %v515 = vsel %vm505, %v511, %v513
        %516 = vrot.lane.b32.xlu0 %v339, 112
        %v517 = vpop.permute.xlu0 %516
        %518 = vrot.lane.b32.xlu0 %v340, 112
        %v519 = vpop.permute.xlu0 %518
        %520 = vrot.lane.b32.xlu0 %v341, 112
        %v521 = vpop.permute.xlu0 %520
        %v522 = vsel %vm505, %v517, %v519
        %v523 = vsel %vm505, %v519, %v521
        %524 = vrot.lane.b32.xlu0 %v325, 111
        %v525 = vpop.permute.xlu0 %524
        %526 = vrot.lane.b32.xlu0 %v326, 111
        %v527 = vpop.permute.xlu0 %526
        %528 = vrot.lane.b32.xlu0 %v327, 111
        %v529 = vpop.permute.xlu0 %528
        %vm530 = vcmask 908288
        %v531 = vsel %vm530, %v525, %v527
        %v532 = vsel %vm530, %v527, %v529
        %533 = vrot.lane.b32.xlu0 %v332, 111
        %v534 = vpop.permute.xlu0 %533
        %535 = vrot.lane.b32.xlu0 %v333, 111
        %v536 = vpop.permute.xlu0 %535
        %537 = vrot.lane.b32.xlu0 %v334, 111
        %v538 = vpop.permute.xlu0 %537
        %v539 = vsel %vm530, %v534, %v536
        %v540 = vsel %vm530, %v536, %v538
        %541 = vrot.lane.b32.xlu0 %v339, 111
        %v542 = vpop.permute.xlu0 %541
        %543 = vrot.lane.b32.xlu0 %v340, 111
        %v544 = vpop.permute.xlu0 %543
        %545 = vrot.lane.b32.xlu0 %v341, 111
        %v546 = vpop.permute.xlu0 %545
        %v547 = vsel %vm530, %v542, %v544
        %v548 = vsel %vm530, %v544, %v546
        %549 = vrot.lane.b32.xlu0 %v332, 108
        %v550 = vpop.permute.xlu0 %549
        %551 = vrot.lane.b32.xlu0 %v333, 108
        %v552 = vpop.permute.xlu0 %551
        %553 = vrot.lane.b32.xlu0 %v334, 108
        %v554 = vpop.permute.xlu0 %553
        %555 = vrot.lane.b32.xlu0 %v339, 108
        %v556 = vpop.permute.xlu0 %555
        %557 = vrot.lane.b32.xlu0 %v340, 108
        %v558 = vpop.permute.xlu0 %557
        %559 = vrot.lane.b32.xlu0 %v341, 108
        %v560 = vpop.permute.xlu0 %559
        %561 = vrot.lane.b32.xlu0 %v506, 108
        %v562 = vpop.permute.xlu0 %561
        %563 = vrot.lane.b32.xlu0 %v507, 108
        %v564 = vpop.permute.xlu0 %563
        %565 = vrot.lane.b32.xlu0 %v504, 108
        %v566 = vpop.permute.xlu0 %565
        %567 = vrot.lane.b32.xlu0 %v514, 108
        %v568 = vpop.permute.xlu0 %567
        %569 = vrot.lane.b32.xlu0 %v515, 108
        %v570 = vpop.permute.xlu0 %569
        %571 = vrot.lane.b32.xlu0 %v513, 108
        %v572 = vpop.permute.xlu0 %571
        %573 = vrot.lane.b32.xlu0 %v522, 108
        %v574 = vpop.permute.xlu0 %573
        %575 = vrot.lane.b32.xlu0 %v523, 108
        %v576 = vpop.permute.xlu0 %575
        %577 = vrot.lane.b32.xlu0 %v521, 108
        %v578 = vpop.permute.xlu0 %577
        %579 = vrot.lane.b32.xlu0 %v531, 108
        %v580 = vpop.permute.xlu0 %579
        %581 = vrot.lane.b32.xlu0 %v532, 108
        %v582 = vpop.permute.xlu0 %581
        %583 = vrot.lane.b32.xlu0 %v529, 108
        %v584 = vpop.permute.xlu0 %583
        %585 = vrot.lane.b32.xlu0 %v539, 108
        %v586 = vpop.permute.xlu0 %585
        %587 = vrot.lane.b32.xlu0 %v540, 108
        %v588 = vpop.permute.xlu0 %587
        %589 = vrot.lane.b32.xlu0 %v538, 108
        %v590 = vpop.permute.xlu0 %589
        %591 = vrot.lane.b32.xlu0 %v547, 108
        %v592 = vpop.permute.xlu0 %591
        %593 = vrot.lane.b32.xlu0 %v548, 108
        %v594 = vpop.permute.xlu0 %593
        %595 = vrot.lane.b32.xlu0 %v546, 108
        %v596 = vpop.permute.xlu0 %595
        %597 = vrot.lane.b32.xlu0 %v426, 108
        %v598 = vpop.permute.xlu0 %597
        %599 = vrot.lane.b32.xlu0 %v427, 108
        %v600 = vpop.permute.xlu0 %599
        %601 = vrot.lane.b32.xlu0 %v424, 108
        %v602 = vpop.permute.xlu0 %601
        %603 = vrot.lane.b32.xlu0 %v437, 108
        %v604 = vpop.permute.xlu0 %603
        %605 = vrot.lane.b32.xlu0 %v438, 108
        %v606 = vpop.permute.xlu0 %605
        %607 = vrot.lane.b32.xlu0 %v436, 108
        %v608 = vpop.permute.xlu0 %607
        %609 = vrot.lane.b32.xlu0 %v448, 108
        %v610 = vpop.permute.xlu0 %609
        %611 = vrot.lane.b32.xlu0 %v449, 108
        %v612 = vpop.permute.xlu0 %611
        %613 = vrot.lane.b32.xlu0 %v447, 108
        %v614 = vpop.permute.xlu0 %613
        %v615 = vsel %vm493, %v550, %v552
        %v616 = vsel %vm493, %v552, %v554
        %v617 = vsel %vm493, %v556, %v558
        %v618 = vsel %vm493, %v558, %v560
        %v619 = vsel %vm493, %v562, %v564
        %v620 = vsel %vm493, %v564, %v566
        %v621 = vsel %vm493, %v568, %v570
        %v622 = vsel %vm493, %v570, %v572
        %v623 = vsel %vm493, %v574, %v576
        %v624 = vsel %vm493, %v576, %v578
        %v625 = vsel %vm493, %v580, %v582
        %v626 = vsel %vm493, %v582, %v584
        %v627 = vsel %vm493, %v586, %v588
        %v628 = vsel %vm493, %v588, %v590
        %v629 = vsel %vm493, %v592, %v594
        %v630 = vsel %vm493, %v594, %v596
        %v631 = vsel %vm493, %v598, %v600
        %v632 = vsel %vm493, %v600, %v602
        %v633 = vsel %vm493, %v604, %v606
        %v634 = vsel %vm493, %v606, %v608
        %v635 = vsel %vm493, %v610, %v612
        %v636 = vsel %vm493, %v612, %v614
        %v670 = vpack.c.bf16 %v332, %v325
        %v671 = vpack.c.bf16 %v333, %v326
        %v672 = vpack.c.bf16 %v334, %v327
        %v673 = vpack.c.bf16 %v352, %v339
        %v674 = vpack.c.bf16 %v353, %v340
        %v675 = vpack.c.bf16 %v350, %v341
        %v676 = vpack.c.bf16 %v380, %v366
        %v677 = vpack.c.bf16 %v381, %v367
        %v678 = vpack.c.bf16 %v379, %v365
        %v679 = vpack.c.bf16 %v403, %v392
        %v680 = vpack.c.bf16 %v404, %v393
        %v681 = vpack.c.bf16 %v402, %v390
        %v682 = vpack.c.bf16 %v426, %v414
        %v683 = vpack.c.bf16 %v427, %v415
        %v684 = vpack.c.bf16 %v424, %v413
        %v685 = vpack.c.bf16 %v448, %v437
        %v686 = vpack.c.bf16 %v449, %v438
        %v687 = vpack.c.bf16 %v447, %v436
        %v688 = vpack.c.bf16 %v471, %v460
        %v689 = vpack.c.bf16 %v472, %v461
        %v690 = vpack.c.bf16 %v470, %v458
        %v691 = vpack.c.bf16 %v494, %v482
        %v692 = vpack.c.bf16 %v495, %v483
        %v693 = vpack.c.bf16 %v492, %v481
        %v694 = vpack.c.bf16 %v617, %v615
        %v695 = vpack.c.bf16 %v618, %v616
        %v696 = vpack.c.bf16 %v560, %v554
        %v697 = vpack.c.bf16 %v621, %v619
        %v698 = vpack.c.bf16 %v622, %v620
        %v699 = vpack.c.bf16 %v572, %v566
        %v700 = vpack.c.bf16 %v625, %v623
        %v701 = vpack.c.bf16 %v626, %v624
        %v702 = vpack.c.bf16 %v584, %v578
        %v703 = vpack.c.bf16 %v629, %v627
        %v704 = vpack.c.bf16 %v630, %v628
        %v705 = vpack.c.bf16 %v596, %v590
        %v706 = vpack.c.bf16 %v633, %v631
        %v707 = vpack.c.bf16 %v634, %v632
        %v708 = vpack.c.bf16 %v608, %v602
        %v709 = vpack.c.bf16 %v635, %v635
        %v710 = vpack.c.bf16 %v636, %v636
        %v711 = vpack.c.bf16 %v614, %v614
        %v713 = vunpack.c.l.b16 %v228
        %v714 = vunpack.c.h.b16 %v228
        %v715 = vpack.c.b16 %v713, %v713
        %v716 = vpack.c.b16 %v714, %v714
        %vm718 = vcmask 719872
        %v720 = vsel %vm718, %v716, 0
        %vm722 = vcmask 1043456
        %v724 = vsel %vm722, %v709, 0
        %v727 = vsel %vm722, %v710, 0
        %v730 = vsel %vm722, %v711, 0
        %732 = vmatprep.subr.bf16.mxu0 %v671
        %733 = vmatpush1.bf16.msra.mxu0 %v670
        %734 = vmatprep.subr.bf16.mxu0 %v674
        %735 = vmatpush1.bf16.msra.mxu0 %v673
        %736 = vmatprep.subr.bf16.mxu0 %v677
        %737 = vmatpush1.bf16.msra.mxu0 %v676
        %738 = vmatprep.subr.bf16.mxu0 %v680
        %739 = vmatpush1.bf16.msra.mxu0 %v679
        %740 = vmatprep.subr.bf16.mxu0 %v683
        %741 = vmatpush1.bf16.msra.mxu0 %v682
        %742 = vmatprep.subr.bf16.mxu0 %v686
        %743 = vmatpush1.bf16.msra.mxu0 %v685
        %744 = vmatprep.subr.bf16.mxu0 %v689
        %745 = vmatpush1.bf16.msra.mxu0 %v688
        %746 = vmatprep.subr.bf16.mxu0 %v692
        %747 = vmatpush1.bf16.msra.mxu0 %v691
        %748 = vmatprep.subr.bf16.mxu0 %v695
        %749 = vmatpush1.bf16.msra.mxu0 %v694
        %750 = vmatprep.subr.bf16.mxu0 %v698
        %751 = vmatpush1.bf16.msra.mxu0 %v697
        %752 = vmatprep.subr.bf16.mxu0 %v701
        %753 = vmatpush1.bf16.msra.mxu0 %v700
        %754 = vmatprep.subr.bf16.mxu0 %v704
        %755 = vmatpush1.bf16.msra.mxu0 %v703
        %756 = vmatprep.subr.bf16.mxu0 %v707
        %757 = vmatpush1.bf16.msra.mxu0 %v706
        %758 = vmatprep.subr.bf16.mxu0 %v727
        %759 = vmatpush1.bf16.msra.mxu0 %v724
        %760 = vmatprep.subr.bf16.mxu0 0
        %761 = vmatpush1.bf16.msra.mxu0 0
        %762 = vmatprep.subr.bf16.mxu0 0
        %763 = vmatpush1.bf16.msra.mxu0 0
        %764 = vmatprep.mubr.bf16.mxu0 %v720
        %765 = vmatmul.mubr.bf16.gmra.mrb[0].mxu0 %v715
        %v766 = vpop.f32.mrb[0].mxu0
        %v767 = vadd.f32 0.0, %v766
        %v768 = vpop.f32.mrb[0].mxu0
        %v769 = vadd.f32 0.0, %v768
        %v770 = vpop.f32.mrb[0].mxu0
        %v771 = vpop.f32.mrb[0].mxu0
        %772 = vdwg.mxu0
        %773 = vmatprep.subr.bf16.mxu0 0
        %774 = vmatpush1.bf16.msra.mxu0 %v672
        %775 = vmatprep.subr.bf16.mxu0 0
        %776 = vmatpush1.bf16.msra.mxu0 %v675
        %777 = vmatprep.subr.bf16.mxu0 0
        %778 = vmatpush1.bf16.msra.mxu0 %v678
        %779 = vmatprep.subr.bf16.mxu0 0
        %780 = vmatpush1.bf16.msra.mxu0 %v681
        %781 = vmatprep.subr.bf16.mxu0 0
        %782 = vmatpush1.bf16.msra.mxu0 %v684
        %783 = vmatprep.subr.bf16.mxu0 0
        %784 = vmatpush1.bf16.msra.mxu0 %v687
        %785 = vmatprep.subr.bf16.mxu0 0
        %786 = vmatpush1.bf16.msra.mxu0 %v690
        %787 = vmatprep.subr.bf16.mxu0 0
        %788 = vmatpush1.bf16.msra.mxu0 %v693
        %789 = vmatprep.subr.bf16.mxu0 0
        %790 = vmatpush1.bf16.msra.mxu0 %v696
        %791 = vmatprep.subr.bf16.mxu0 0
        %792 = vmatpush1.bf16.msra.mxu0 %v699
        %793 = vmatprep.subr.bf16.mxu0 0
        %794 = vmatpush1.bf16.msra.mxu0 %v702
        %795 = vmatprep.subr.bf16.mxu0 0
        %796 = vmatpush1.bf16.msra.mxu0 %v705
        %797 = vmatprep.subr.bf16.mxu0 0
        %798 = vmatpush1.bf16.msra.mxu0 %v708
        %799 = vmatprep.subr.bf16.mxu0 0
        %800 = vmatpush1.bf16.msra.mxu0 %v730
        %801 = vmatprep.subr.bf16.mxu0 0
        %802 = vmatpush1.bf16.msra.mxu0 0
        %803 = vmatprep.subr.bf16.mxu0 0
        %804 = vmatpush1.bf16.msra.mxu0 0
        %805 = vmatprep.mubr.bf16.mxu0 %v720
        %806 = vmatmul.mubr.bf16.gmra.mrb[0].mxu0 %v715
        %v807 = vpop.f32.mrb[0].mxu0
        %v808 = vadd.f32 0.0, %v807
        %v809 = vpop.f32.mrb[0].mxu0
        %v810 = vpop.f32.mrb[0].mxu0
        %v811 = vpop.f32.mrb[0].mxu0
        %812 = vdwg.mxu0
        %814 = vset.pattern.permute.xlu0 3
        %815 = vperm.xlu0 %814, %v226
        %v816 = vpop.permute.xlu0 %815
        %v818 = vmul.f32 %v767, %v816
        %v819 = vmul.f32 %v769, %v816
        %v820 = vmul.f32 %v808, %v816
        %821 = vset.pattern.permute.xlu0 4
        %822 = vperm.xlu0 %821, %v226
        %v823 = vpop.permute.xlu0 %822
        %v825 = vadd.f32 %v818, %v823
        %v826 = vadd.f32 %v819, %v823
        %v827 = vadd.f32 %v820, %v823
        %vm828 = vcmp.gt.f32.partialorder %v825, 0.0
        %vm829 = vcmp.gt.f32.partialorder %v826, 0.0
        %vm830 = vcmp.gt.f32.partialorder %v827, 0.0
        %831 = vset.pattern.permute.xlu0 5
        %832 = vperm.xlu0 %831, %v226
        %v833 = vpop.permute.xlu0 %832
        %v835 = vmul.f32 %v833, %v825
        %v836 = vmul.f32 %v833, %v826
        %v837 = vmul.f32 %v833, %v827
        %v838 = vsel %vm828, %v825, %v835
        %v839 = vsel %vm829, %v826, %v836
        %v840 = vsel %vm830, %v827, %v837
        %v842 = vlaneseq
        %v843 = vshrl.u32 %v842, 7
        %v844 = vsub.s32 0, %v843
        %v845 = vrot.slane %v227, %v844
        %v846 = vlaneseq
        %v847 = vshrl.u32 %v846, 7
        %v848 = vsub.s32 1, %v847
        %v849 = vrot.slane %v227, %v848
        %v850 = vlaneseq
        %v851 = vshrl.u32 %v850, 7
        %v852 = vsub.s32 2, %v851
        %v853 = vrot.slane %v227, %v852
        %854 = vrot.lane.b32.xlu0 %v845, 109
        %v855 = vpop.permute.xlu0 %854
        %856 = vrot.lane.b32.xlu0 %v849, 109
        %v857 = vpop.permute.xlu0 %856
        %858 = vrot.lane.b32.xlu0 %v853, 109
        %v859 = vpop.permute.xlu0 %858
        %v860 = vsel %vm459, %v855, %v857
        %v861 = vsel %vm459, %v857, %v859
        %v865 = vmul.f32 %v838, %v860
        %v866 = vmul.f32 %v839, %v861
        %v867 = vmul.f32 %v840, %v859
        %v868 = vpack.c.bf16 %v865, %v865
        %v869 = vpack.c.bf16 %v866, %v866
        %v870 = vpack.c.bf16 %v867, %v867
        %v871 = vunpack.c.l.bf16 %v868
        %v872 = vunpack.c.l.bf16 %v869
        %v873 = vunpack.c.l.bf16 %v870
        %877 = vrot.lane.b32.xlu0 %v871, 19
        %v878 = vpop.permute.xlu0 %877
        %879 = vrot.lane.b32.xlu0 %v872, 19
        %v880 = vpop.permute.xlu0 %879
        %881 = vrot.lane.b32.xlu0 %v873, 19
        %v882 = vpop.permute.xlu0 %881
        %vm883 = vcmask 154624
        %v884 = vsel %vm883, %v878, %v880
        %v885 = vsel %vm883, %v880, %v882
        %v889 = vsel %vm883, 0.0, %v878
        %vm890 = vcmask 416768
        %v891 = vsel %vm890, %v885, 0.0
        %s892 = smul.addr %s329, 8
        %s893 = scalar_lea.vmem [#allocation3], %s892
        %894 = vst [vmem:[%s893] sm:$0xff] %v889
        %895 = vst [vmem:[%s893 + $0x8] sm:$0xff] %v884
        %896 = vst.msk [vmem:[%s893 + $0x10] sm:$0xff] %vm232, %v891
      $region52: #{dualres_forward.1} parent=39 // loop_footer
        %s321 = sadd.s32 1, %s317
      $region53: #{dualres_forward.1} parent=39 // loop_footer_branch
        %316 = sbr.rel target = $region49
      $region54: #{dualres_forward.1} parent=39 // loop_exit
        _
      loop: start=0, step=1, limit=16
      $region55: #{dualres_forward.1} parent=39 // loop_pre_header
        _
      $region56: #{dualres_forward.1} parent=39 // loop_header
        %s898 = sphi 0, %s902
        %p899 = scmp.ge.s32.totalorder %s898, 16
      $region57: #{dualres_forward.1} parent=39 // loop_header_branch
        %901 = sbr.rel (%p899) target = $region61
      $region58: #{dualres_forward.1} parent=39 // loop_body
        %s903 = smul.u32 %s898, 3
        %s904 = smul.addr %s903, 8
        %s905 = scalar_lea.vmem [#allocation3], %s904
        %v906 = vld [vmem:[%s905] sm:$0xff]
        %v907 = vld [vmem:[%s905 + $0x8] sm:$0xff]
        %v908 = vld [vmem:[%s905 + $0x10] sm:$0xff]
        %s909 = sadd.s32 %s898, 1
        %s910 = smul.u32 %s909, 3
        %s911 = smul.addr %s910, 8
        %s912 = scalar_lea.vmem [#allocation3], %s911
        %v913 = vld [vmem:[%s912] sm:$0xff]
        %v914 = vld [vmem:[%s912 + $0x8] sm:$0xff]
        %v915 = vld [vmem:[%s912 + $0x10] sm:$0xff]
        %s916 = sadd.s32 %s898, 2
        %s917 = smul.u32 %s916, 3
        %s918 = smul.addr %s917, 8
        %s919 = scalar_lea.vmem [#allocation3], %s918
        %v920 = vld [vmem:[%s919] sm:$0xff]
        %v921 = vld [vmem:[%s919 + $0x8] sm:$0xff]
        %v922 = vld [vmem:[%s919 + $0x10] sm:$0xff]
        %926 = vrot.lane.b32.xlu0 %v906, 127
        %v927 = vpop.permute.xlu0 %926
        %928 = vrot.lane.b32.xlu0 %v907, 127
        %v929 = vpop.permute.xlu0 %928
        %930 = vrot.lane.b32.xlu0 %v908, 127
        %v931 = vpop.permute.xlu0 %930
        %vm932 = vcmask 1039360
        %v933 = vsel %vm932, %v927, %v929
        %v934 = vsel %vm932, %v929, %v931
        %941 = vrot.lane.b32.xlu0 %v913, 127
        %v942 = vpop.permute.xlu0 %941
        %943 = vrot.lane.b32.xlu0 %v914, 127
        %v944 = vpop.permute.xlu0 %943
        %945 = vrot.lane.b32.xlu0 %v915, 127
        %v946 = vpop.permute.xlu0 %945
        %v947 = vsel %vm932, %v942, %v944
        %v948 = vsel %vm932, %v944, %v946
        %955 = vrot.lane.b32.xlu0 %v920, 127
        %v956 = vpop.permute.xlu0 %955
        %957 = vrot.lane.b32.xlu0 %v921, 127
        %v958 = vpop.permute.xlu0 %957
        %959 = vrot.lane.b32.xlu0 %v922, 127
        %v960 = vpop.permute.xlu0 %959
        %v961 = vsel %vm932, %v956, %v958
        %v962 = vsel %vm932, %v958, %v960
        %966 = vrot.lane.b32.xlu0 %v906, 126
        %v967 = vpop.permute.xlu0 %966
        %968 = vrot.lane.b32.xlu0 %v907, 126
        %v969 = vpop.permute.xlu0 %968
        %970 = vrot.lane.b32.xlu0 %v908, 126
        %v971 = vpop.permute.xlu0 %970
        %vm972 = vcmask 1031168
        %v973 = vsel %vm972, %v967, %v969
        %v974 = vsel %vm972, %v969, %v971
        %978 = vrot.lane.b32.xlu0 %v913, 126
        %v979 = vpop.permute.xlu0 %978
        %980 = vrot.lane.b32.xlu0 %v914, 126
        %v981 = vpop.permute.xlu0 %980
        %982 = vrot.lane.b32.xlu0 %v915, 126
        %v983 = vpop.permute.xlu0 %982
        %v984 = vsel %vm972, %v979, %v981
        %v985 = vsel %vm972, %v981, %v983
        %989 = vrot.lane.b32.xlu0 %v920, 126
        %v990 = vpop.permute.xlu0 %989
        %991 = vrot.lane.b32.xlu0 %v921, 126
        %v992 = vpop.permute.xlu0 %991
        %993 = vrot.lane.b32.xlu0 %v922, 126
        %v994 = vpop.permute.xlu0 %993
        %v995 = vsel %vm972, %v990, %v992
        %v996 = vsel %vm972, %v992, %v994
        %1000 = vrot.lane.b32.xlu0 %v906, 110
        %v1001 = vpop.permute.xlu0 %1000
        %1002 = vrot.lane.b32.xlu0 %v907, 110
        %v1003 = vpop.permute.xlu0 %1002
        %1004 = vrot.lane.b32.xlu0 %v908, 110
        %v1005 = vpop.permute.xlu0 %1004
        %vm1006 = vcmask 900096
        %v1007 = vsel %vm1006, %v1001, %v1003
        %v1008 = vsel %vm1006, %v1003, %v1005
        %1012 = vrot.lane.b32.xlu0 %v913, 110
        %v1013 = vpop.permute.xlu0 %1012
        %1014 = vrot.lane.b32.xlu0 %v914, 110
        %v1015 = vpop.permute.xlu0 %1014
        %1016 = vrot.lane.b32.xlu0 %v915, 110
        %v1017 = vpop.permute.xlu0 %1016
        %v1018 = vsel %vm1006, %v1013, %v1015
        %v1019 = vsel %vm1006, %v1015, %v1017
        %1023 = vrot.lane.b32.xlu0 %v920, 110
        %v1024 = vpop.permute.xlu0 %1023
        %1025 = vrot.lane.b32.xlu0 %v921, 110
        %v1026 = vpop.permute.xlu0 %1025
        %1027 = vrot.lane.b32.xlu0 %v922, 110
        %v1028 = vpop.permute.xlu0 %1027
        %v1029 = vsel %vm1006, %v1024, %v1026
        %v1030 = vsel %vm1006, %v1026, %v1028
        %1034 = vrot.lane.b32.xlu0 %v906, 109
        %v1035 = vpop.permute.xlu0 %1034
        %1036 = vrot.lane.b32.xlu0 %v907, 109
        %v1037 = vpop.permute.xlu0 %1036
        %1038 = vrot.lane.b32.xlu0 %v908, 109
        %v1039 = vpop.permute.xlu0 %1038
        %vm1040 = vcmask 891904
        %v1041 = vsel %vm1040, %v1035, %v1037
        %v1042 = vsel %vm1040, %v1037, %v1039
        %1046 = vrot.lane.b32.xlu0 %v913, 109
        %v1047 = vpop.permute.xlu0 %1046
        %1048 = vrot.lane.b32.xlu0 %v914, 109
        %v1049 = vpop.permute.xlu0 %1048
        %1050 = vrot.lane.b32.xlu0 %v915, 109
        %v1051 = vpop.permute.xlu0 %1050
        %v1052 = vsel %vm1040, %v1047, %v1049
        %v1053 = vsel %vm1040, %v1049, %v1051
        %1057 = vrot.lane.b32.xlu0 %v920, 109
        %v1058 = vpop.permute.xlu0 %1057
        %1059 = vrot.lane.b32.xlu0 %v921, 109
        %v1060 = vpop.permute.xlu0 %1059
        %1061 = vrot.lane.b32.xlu0 %v922, 109
        %v1062 = vpop.permute.xlu0 %1061
        %v1063 = vsel %vm1040, %v1058, %v1060
        %v1064 = vsel %vm1040, %v1060, %v1062
        %1068 = vrot.lane.b32.xlu0 %v906, 108
        %v1069 = vpop.permute.xlu0 %1068
        %1070 = vrot.lane.b32.xlu0 %v907, 108
        %v1071 = vpop.permute.xlu0 %1070
        %1072 = vrot.lane.b32.xlu0 %v908, 108
        %v1073 = vpop.permute.xlu0 %1072
        %vm1074 = vcmask 883712
        %v1075 = vsel %vm1074, %v1069, %v1071
        %v1076 = vsel %vm1074, %v1071, %v1073
        %1080 = vrot.lane.b32.xlu0 %v906, 112
        %v1081 = vpop.permute.xlu0 %1080
        %1082 = vrot.lane.b32.xlu0 %v907, 112
        %v1083 = vpop.permute.xlu0 %1082
        %1084 = vrot.lane.b32.xlu0 %v908, 112
        %v1085 = vpop.permute.xlu0 %1084
        %vm1086 = vcmask 916480
        %v1087 = vsel %vm1086, %v1081, %v1083
        %v1088 = vsel %vm1086, %v1083, %v1085
        %1089 = vrot.lane.b32.xlu0 %v913, 112
        %v1090 = vpop.permute.xlu0 %1089
        %1091 = vrot.lane.b32.xlu0 %v914, 112
        %v1092 = vpop.permute.xlu0 %1091
        %1093 = vrot.lane.b32.xlu0 %v915, 112
        %v1094 = vpop.permute.xlu0 %1093
        %v1095 = vsel %vm1086, %v1090, %v1092
        %v1096 = vsel %vm1086, %v1092, %v1094
        %1097 = vrot.lane.b32.xlu0 %v920, 112
        %v1098 = vpop.permute.xlu0 %1097
        %1099 = vrot.lane.b32.xlu0 %v921, 112
        %v1100 = vpop.permute.xlu0 %1099
        %1101 = vrot.lane.b32.xlu0 %v922, 112
        %v1102 = vpop.permute.xlu0 %1101
        %v1103 = vsel %vm1086, %v1098, %v1100
        %v1104 = vsel %vm1086, %v1100, %v1102
        %1105 = vrot.lane.b32.xlu0 %v906, 111
        %v1106 = vpop.permute.xlu0 %1105
        %1107 = vrot.lane.b32.xlu0 %v907, 111
        %v1108 = vpop.permute.xlu0 %1107
        %1109 = vrot.lane.b32.xlu0 %v908, 111
        %v1110 = vpop.permute.xlu0 %1109
        %vm1111 = vcmask 908288
        %v1112 = vsel %vm1111, %v1106, %v1108
        %v1113 = vsel %vm1111, %v1108, %v1110
        %1114 = vrot.lane.b32.xlu0 %v913, 111
        %v1115 = vpop.permute.xlu0 %1114
        %1116 = vrot.lane.b32.xlu0 %v914, 111
        %v1117 = vpop.permute.xlu0 %1116
        %1118 = vrot.lane.b32.xlu0 %v915, 111
        %v1119 = vpop.permute.xlu0 %1118
        %v1120 = vsel %vm1111, %v1115, %v1117
        %v1121 = vsel %vm1111, %v1117, %v1119
        %1122 = vrot.lane.b32.xlu0 %v920, 111
        %v1123 = vpop.permute.xlu0 %1122
        %1124 = vrot.lane.b32.xlu0 %v921, 111
        %v1125 = vpop.permute.xlu0 %1124
        %1126 = vrot.lane.b32.xlu0 %v922, 111
        %v1127 = vpop.permute.xlu0 %1126
        %v1128 = vsel %vm1111, %v1123, %v1125
        %v1129 = vsel %vm1111, %v1125, %v1127
        %1130 = vrot.lane.b32.xlu0 %v913, 108
        %v1131 = vpop.permute.xlu0 %1130
        %1132 = vrot.lane.b32.xlu0 %v914, 108
        %v1133 = vpop.permute.xlu0 %1132
        %1134 = vrot.lane.b32.xlu0 %v915, 108
        %v1135 = vpop.permute.xlu0 %1134
        %1136 = vrot.lane.b32.xlu0 %v920, 108
        %v1137 = vpop.permute.xlu0 %1136
        %1138 = vrot.lane.b32.xlu0 %v921, 108
        %v1139 = vpop.permute.xlu0 %1138
        %1140 = vrot.lane.b32.xlu0 %v922, 108
        %v1141 = vpop.permute.xlu0 %1140
        %1142 = vrot.lane.b32.xlu0 %v1087, 108
        %v1143 = vpop.permute.xlu0 %1142
        %1144 = vrot.lane.b32.xlu0 %v1088, 108
        %v1145 = vpop.permute.xlu0 %1144
        %1146 = vrot.lane.b32.xlu0 %v1085, 108
        %v1147 = vpop.permute.xlu0 %1146
        %1148 = vrot.lane.b32.xlu0 %v1095, 108
        %v1149 = vpop.permute.xlu0 %1148
        %1150 = vrot.lane.b32.xlu0 %v1096, 108
        %v1151 = vpop.permute.xlu0 %1150
        %1152 = vrot.lane.b32.xlu0 %v1094, 108
        %v1153 = vpop.permute.xlu0 %1152
        %1154 = vrot.lane.b32.xlu0 %v1103, 108
        %v1155 = vpop.permute.xlu0 %1154
        %1156 = vrot.lane.b32.xlu0 %v1104, 108
        %v1157 = vpop.permute.xlu0 %1156
        %1158 = vrot.lane.b32.xlu0 %v1102, 108
        %v1159 = vpop.permute.xlu0 %1158
        %1160 = vrot.lane.b32.xlu0 %v1112, 108
        %v1161 = vpop.permute.xlu0 %1160
        %1162 = vrot.lane.b32.xlu0 %v1113, 108
        %v1163 = vpop.permute.xlu0 %1162
        %1164 = vrot.lane.b32.xlu0 %v1110, 108
        %v1165 = vpop.permute.xlu0 %1164
        %1166 = vrot.lane.b32.xlu0 %v1120, 108
        %v1167 = vpop.permute.xlu0 %1166
        %1168 = vrot.lane.b32.xlu0 %v1121, 108
        %v1169 = vpop.permute.xlu0 %1168
        %1170 = vrot.lane.b32.xlu0 %v1119, 108
        %v1171 = vpop.permute.xlu0 %1170
        %1172 = vrot.lane.b32.xlu0 %v1128, 108
        %v1173 = vpop.permute.xlu0 %1172
        %1174 = vrot.lane.b32.xlu0 %v1129, 108
        %v1175 = vpop.permute.xlu0 %1174
        %1176 = vrot.lane.b32.xlu0 %v1127, 108
        %v1177 = vpop.permute.xlu0 %1176
        %1178 = vrot.lane.b32.xlu0 %v1007, 108
        %v1179 = vpop.permute.xlu0 %1178
        %1180 = vrot.lane.b32.xlu0 %v1008, 108
        %v1181 = vpop.permute.xlu0 %1180
        %1182 = vrot.lane.b32.xlu0 %v1005, 108
        %v1183 = vpop.permute.xlu0 %1182
        %1184 = vrot.lane.b32.xlu0 %v1018, 108
        %v1185 = vpop.permute.xlu0 %1184
        %1186 = vrot.lane.b32.xlu0 %v1019, 108
        %v1187 = vpop.permute.xlu0 %1186
        %1188 = vrot.lane.b32.xlu0 %v1017, 108
        %v1189 = vpop.permute.xlu0 %1188
        %1190 = vrot.lane.b32.xlu0 %v1029, 108
        %v1191 = vpop.permute.xlu0 %1190
        %1192 = vrot.lane.b32.xlu0 %v1030, 108
        %v1193 = vpop.permute.xlu0 %1192
        %1194 = vrot.lane.b32.xlu0 %v1028, 108
        %v1195 = vpop.permute.xlu0 %1194
        %v1196 = vsel %vm1074, %v1131, %v1133
        %v1197 = vsel %vm1074, %v1133, %v1135
        %v1198 = vsel %vm1074, %v1137, %v1139
        %v1199 = vsel %vm1074, %v1139, %v1141
        %v1200 = vsel %vm1074, %v1143, %v1145
        %v1201 = vsel %vm1074, %v1145, %v1147
        %v1202 = vsel %vm1074, %v1149, %v1151
        %v1203 = vsel %vm1074, %v1151, %v1153
        %v1204 = vsel %vm1074, %v1155, %v1157
        %v1205 = vsel %vm1074, %v1157, %v1159
        %v1206 = vsel %vm1074, %v1161, %v1163
        %v1207 = vsel %vm1074, %v1163, %v1165
        %v1208 = vsel %vm1074, %v1167, %v1169
        %v1209 = vsel %vm1074, %v1169, %v1171
        %v1210 = vsel %vm1074, %v1173, %v1175
        %v1211 = vsel %vm1074, %v1175, %v1177
        %v1212 = vsel %vm1074, %v1179, %v1181
        %v1213 = vsel %vm1074, %v1181, %v1183
        %v1214 = vsel %vm1074, %v1185, %v1187
        %v1215 = vsel %vm1074, %v1187, %v1189
        %v1216 = vsel %vm1074, %v1191, %v1193
        %v1217 = vsel %vm1074, %v1193, %v1195
        %v1251 = vpack.c.bf16 %v913, %v906
        %v1252 = vpack.c.bf16 %v914, %v907
        %v1253 = vpack.c.bf16 %v915, %v908
        %v1254 = vpack.c.bf16 %v933, %v920
        %v1255 = vpack.c.bf16 %v934, %v921
        %v1256 = vpack.c.bf16 %v931, %v922
        %v1257 = vpack.c.bf16 %v961, %v947
        %v1258 = vpack.c.bf16 %v962, %v948
        %v1259 = vpack.c.bf16 %v960, %v946
        %v1260 = vpack.c.bf16 %v984, %v973
        %v1261 = vpack.c.bf16 %v985, %v974
        %v1262 = vpack.c.bf16 %v983, %v971
        %v1263 = vpack.c.bf16 %v1007, %v995
        %v1264 = vpack.c.bf16 %v1008, %v996
        %v1265 = vpack.c.bf16 %v1005, %v994
        %v1266 = vpack.c.bf16 %v1029, %v1018
        %v1267 = vpack.c.bf16 %v1030, %v1019
        %v1268 = vpack.c.bf16 %v1028, %v1017
        %v1269 = vpack.c.bf16 %v1052, %v1041
        %v1270 = vpack.c.bf16 %v1053, %v1042
        %v1271 = vpack.c.bf16 %v1051, %v1039
        %v1272 = vpack.c.bf16 %v1075, %v1063
        %v1273 = vpack.c.bf16 %v1076, %v1064
        %v1274 = vpack.c.bf16 %v1073, %v1062
        %v1275 = vpack.c.bf16 %v1198, %v1196
        %v1276 = vpack.c.bf16 %v1199, %v1197
        %v1277 = vpack.c.bf16 %v1141, %v1135
        %v1278 = vpack.c.bf16 %v1202, %v1200
        %v1279 = vpack.c.bf16 %v1203, %v1201
        %v1280 = vpack.c.bf16 %v1153, %v1147
        %v1281 = vpack.c.bf16 %v1206, %v1204
        %v1282 = vpack.c.bf16 %v1207, %v1205
        %v1283 = vpack.c.bf16 %v1165, %v1159
        %v1284 = vpack.c.bf16 %v1210, %v1208
        %v1285 = vpack.c.bf16 %v1211, %v1209
        %v1286 = vpack.c.bf16 %v1177, %v1171
        %v1287 = vpack.c.bf16 %v1214, %v1212
        %v1288 = vpack.c.bf16 %v1215, %v1213
        %v1289 = vpack.c.bf16 %v1189, %v1183
        %v1290 = vpack.c.bf16 %v1216, %v1216
        %v1291 = vpack.c.bf16 %v1217, %v1217
        %v1292 = vpack.c.bf16 %v1195, %v1195
        %s1293 = smul.addr %s910, 8
        %s1294 = scalar_lea.vmem %s219, %s1293
        %v1295 = vld [vmem:[%s1294] sm:$0xff]
        %v1296 = vld [vmem:[%s1294 + $0x8] sm:$0xff]
        %v1297 = vld [vmem:[%s1294 + $0x10] sm:$0xff]
        %1299 = vset.pattern.permute.xlu0 6
        %1300 = vperm.xlu0 %1299, %v226
        %v1301 = vpop.permute.xlu0 %1300
        %v1304 = vunpack.c.l.b16 %v229
        %v1305 = vunpack.c.h.b16 %v229
        %v1306 = vpack.c.b16 %v1304, %v1304
        %v1307 = vpack.c.b16 %v1305, %v1305
        %vm1309 = vcmask 719872
        %v1311 = vsel %vm1309, %v1307, 0
        %vm1313 = vcmask 1043456
        %v1315 = vsel %vm1313, %v1290, 0
        %v1318 = vsel %vm1313, %v1291, 0
        %v1321 = vsel %vm1313, %v1292, 0
        %1323 = vmatprep.subr.bf16.mxu0 %v1252
        %1324 = vmatpush1.bf16.msra.mxu0 %v1251
        %1325 = vmatprep.subr.bf16.mxu0 %v1255
        %1326 = vmatpush1.bf16.msra.mxu0 %v1254
        %1327 = vmatprep.subr.bf16.mxu0 %v1258
        %1328 = vmatpush1.bf16.msra.mxu0 %v1257
        %1329 = vmatprep.subr.bf16.mxu0 %v1261
        %1330 = vmatpush1.bf16.msra.mxu0 %v1260
        %1331 = vmatprep.subr.bf16.mxu0 %v1264
        %1332 = vmatpush1.bf16.msra.mxu0 %v1263
        %1333 = vmatprep.subr.bf16.mxu0 %v1267
        %1334 = vmatpush1.bf16.msra.mxu0 %v1266
        %1335 = vmatprep.subr.bf16.mxu0 %v1270
        %1336 = vmatpush1.bf16.msra.mxu0 %v1269
        %1337 = vmatprep.subr.bf16.mxu0 %v1273
        %1338 = vmatpush1.bf16.msra.mxu0 %v1272
        %1339 = vmatprep.subr.bf16.mxu0 %v1276
        %1340 = vmatpush1.bf16.msra.mxu0 %v1275
        %1341 = vmatprep.subr.bf16.mxu0 %v1279
        %1342 = vmatpush1.bf16.msra.mxu0 %v1278
        %1343 = vmatprep.subr.bf16.mxu0 %v1282
        %1344 = vmatpush1.bf16.msra.mxu0 %v1281
        %1345 = vmatprep.subr.bf16.mxu0 %v1285
        %1346 = vmatpush1.bf16.msra.mxu0 %v1284
        %1347 = vmatprep.subr.bf16.mxu0 %v1288
        %1348 = vmatpush1.bf16.msra.mxu0 %v1287
        %1349 = vmatprep.subr.bf16.mxu0 %v1318
        %1350 = vmatpush1.bf16.msra.mxu0 %v1315
        %1351 = vmatprep.subr.bf16.mxu0 0
        %1352 = vmatpush1.bf16.msra.mxu0 0
        %1353 = vmatprep.subr.bf16.mxu0 0
        %1354 = vmatpush1.bf16.msra.mxu0 0
        %1355 = vmatprep.mubr.bf16.mxu0 %v1311
        %1356 = vmatmul.mubr.bf16.gmra.mrb[0].mxu0 %v1306
        %v1357 = vpop.f32.mrb[0].mxu0
        %v1358 = vadd.f32 %v1301, %v1357
        %v1359 = vpop.f32.mrb[0].mxu0
        %v1360 = vadd.f32 %v1301, %v1359
        %v1361 = vpop.f32.mrb[0].mxu0
        %v1362 = vpop.f32.mrb[0].mxu0
        %1363 = vdwg.mxu0
        %1364 = vmatprep.subr.bf16.mxu0 0
        %1365 = vmatpush1.bf16.msra.mxu0 %v1253
        %1366 = vmatprep.subr.bf16.mxu0 0
        %1367 = vmatpush1.bf16.msra.mxu0 %v1256
        %1368 = vmatprep.subr.bf16.mxu0 0
        %1369 = vmatpush1.bf16.msra.mxu0 %v1259
        %1370 = vmatprep.subr.bf16.mxu0 0
        %1371 = vmatpush1.bf16.msra.mxu0 %v1262
        %1372 = vmatprep.subr.bf16.mxu0 0
        %1373 = vmatpush1.bf16.msra.mxu0 %v1265
        %1374 = vmatprep.subr.bf16.mxu0 0
        %1375 = vmatpush1.bf16.msra.mxu0 %v1268
        %1376 = vmatprep.subr.bf16.mxu0 0
        %1377 = vmatpush1.bf16.msra.mxu0 %v1271
        %1378 = vmatprep.subr.bf16.mxu0 0
        %1379 = vmatpush1.bf16.msra.mxu0 %v1274
        %1380 = vmatprep.subr.bf16.mxu0 0
        %1381 = vmatpush1.bf16.msra.mxu0 %v1277
        %1382 = vmatprep.subr.bf16.mxu0 0
        %1383 = vmatpush1.bf16.msra.mxu0 %v1280
        %1384 = vmatprep.subr.bf16.mxu0 0
        %1385 = vmatpush1.bf16.msra.mxu0 %v1283
        %1386 = vmatprep.subr.bf16.mxu0 0
        %1387 = vmatpush1.bf16.msra.mxu0 %v1286
        %1388 = vmatprep.subr.bf16.mxu0 0
        %1389 = vmatpush1.bf16.msra.mxu0 %v1289
        %1390 = vmatprep.subr.bf16.mxu0 0
        %1391 = vmatpush1.bf16.msra.mxu0 %v1321
        %1392 = vmatprep.subr.bf16.mxu0 0
        %1393 = vmatpush1.bf16.msra.mxu0 0
        %1394 = vmatprep.subr.bf16.mxu0 0
        %1395 = vmatpush1.bf16.msra.mxu0 0
        %1396 = vmatprep.mubr.bf16.mxu0 %v1311
        %1397 = vmatmul.mubr.bf16.gmra.mrb[0].mxu0 %v1306
        %v1398 = vpop.f32.mrb[0].mxu0
        %v1399 = vadd.f32 %v1301, %v1398
        %v1400 = vpop.f32.mrb[0].mxu0
        %v1401 = vpop.f32.mrb[0].mxu0
        %v1402 = vpop.f32.mrb[0].mxu0
        %1403 = vdwg.mxu0
        %1407 = vrot.lane.b32.xlu0 %v1295, 109
        %v1408 = vpop.permute.xlu0 %1407
        %1409 = vrot.lane.b32.xlu0 %v1296, 109
        %v1410 = vpop.permute.xlu0 %1409
        %1411 = vrot.lane.b32.xlu0 %v1297, 109
        %v1412 = vpop.permute.xlu0 %1411
        %v1413 = vsel %vm1040, %v1408, %v1410
        %v1414 = vsel %vm1040, %v1410, %v1412
        %v1418 = vadd.f32 %v1358, %v1413
        %v1419 = vadd.f32 %v1360, %v1414
        %v1420 = vadd.f32 %v1399, %v1412
        %s1421 = smul.addr %s903, 8
        %s1422 = scalar_lea.vmem %s224, %s1421
        %1423 = vst [vmem:[%s1422] sm:$0xff] %v1418
        %1424 = vst [vmem:[%s1422 + $0x8] sm:$0xff] %v1419
        %vm1425 = vcmask 261120
        %1426 = vst.msk [vmem:[%s1422 + $0x10] sm:$0xff] %vm1425, %v1420
      $region59: #{dualres_forward.1} parent=39 // loop_footer
        %s902 = sadd.s32 1, %s898
      $region60: #{dualres_forward.1} parent=39 // loop_footer_branch
        %897 = sbr.rel target = $region56
      $region61: #{dualres_forward.1} parent=39 // loop_exit
        _
      %p1427 = scmp.lt.s32.totalorder %s16, 1
      %s1428 = scalar_select %p1427, %s16, 1
      %s1429 = smul.addr %s1428, 48
      %s1430 = smul.addr %s1429, 8
      %s1431 = scalar_lea.vmem %s5, %s1430
      // Predicated region
      $region62: #{dualres_forward.1} parent=39 // pred_check
        %p1432 = pneg %p144
      $region63: #{dualres_forward.1} parent=39 // pred_check_branch
        %1434 = sbr.rel (%p1432) target = $region65
      $region64: #{dualres_forward.1} parent=39 // pred_region
        _
      $region65: #{dualres_forward.1} parent=39 // pred_fallthru
        _
    $region40: #{dualres_forward.1} parent=5 // pred_fallthru
      _
    %p1435 = scmp.le.s32.totalorder 2, %s11
    // Predicated region
    $region66: #{dualres_forward.1} parent=5 // pred_check
      %p1436 = pneg %p1435
    $region67: #{dualres_forward.1} parent=5 // pred_check_branch
      %1438 = sbr.rel (%p1436) target = $region69
    $region68: #{dualres_forward.1} parent=5 // pred_region
      %s1439 = ssub.s32 %s11, 2
      // Predicated region
      $region70: #{dualres_forward.1} parent=68 // pred_check
        %p1440 = pneg %p150
      $region71: #{dualres_forward.1} parent=68 // pred_check_branch
        %1442 = sbr.rel (%p1440) target = $region73
      $region72: #{dualres_forward.1} parent=68 // pred_region
        %p1443 = scmp.lt.s32.totalorder %s17, 1
        %s1444 = scalar_select %p1443, %s17, 1
        %s1445 = smul.addr %s1444, 48
        %s1446 = smul.addr %s1445, 8
        %s1447 = scalar_lea.vmem %s5, %s1446
      $region73: #{dualres_forward.1} parent=68 // pred_fallthru
        _
    $region69: #{dualres_forward.1} parent=5 // pred_fallthru
      _
  $region6: #{dualres_forward.1} parent=0 // loop_footer
    %s15 = sadd.s32 1, %s11
  $region7: #{dualres_forward.1} parent=0 // loop_footer_branch
    %10 = sbr.rel target = $region3
  $region8: #{dualres_forward.1} parent=0 // loop_exit
    _

</llo_original>
